<compile_context>
chip_gen: v7x
topology: tpu7x:2x2x1
jax: 0.10.0
libtpu: 0.0.40
codegen_flags: <defaults>
</compile_context>

<pallas_src>
import functools

import jax
import jax.numpy as jnp
from jax.experimental import pallas as pl
from jax.experimental.pallas import tpu as pltpu

EPS = 1e-5  # nn.LayerNorm default eps


# ---------------------------------------------------------------------------
# in-kernel helpers
# ---------------------------------------------------------------------------
def _layernorm(x, gamma, beta):
    # PyTorch LayerNorm: biased variance over last dim.
    mu = jnp.mean(x, axis=-1, keepdims=True)
    var = jnp.mean((x - mu) ** 2, axis=-1, keepdims=True)
    return (x - mu) * jax.lax.rsqrt(var + EPS) * gamma + beta


def _gelu_exact(x):
    # nn.GELU() default = exact (erf based)
    return 0.5 * x * (1.0 + jax.lax.erf(x * (2.0 ** -0.5)))


# ---------------------------------------------------------------------------
# fused Pallas kernel: one grid step = (one batch chunk, one layer)
# ---------------------------------------------------------------------------
def transformer_stack_kernel(x_ref,
                             ln1_g_ref, ln1_b_ref, wqkv_ref, wout_ref, bout_ref,
                             ln2_g_ref, ln2_b_ref, w1_ref, b1_ref, w2_ref, b2_ref,
                             o_ref, *scratch,
                             heads, dim_head, approx_recip):
    l = pl.program_id(1)
    n_layers = pl.num_programs(1)
    Bc, N, D = x_ref.shape
    inner = heads * dim_head
    scale = dim_head ** -0.5

    # Activation accumulator: directly in the (VMEM-resident across depth) output block
    # when the activation dtype is f32, else in a dedicated f32 scratch buffer.
    acc_ref = scratch[0] if scratch else o_ref

    @pl.when(l == 0)
    def _():
        acc_ref[...] = x_ref[...].astype(acc_ref.dtype)

    x = acc_ref[...].astype(jnp.float32).reshape(Bc * N, D)
    wdt = wqkv_ref.dtype  # matmul operand dtype (f32, or bf16 in production)

    # ---------------- PreNorm + Attention + residual ----------------
    xn = _layernorm(x, ln1_g_ref[0, 0], ln1_b_ref[0, 0])                  # (Bc*N, D)

    # Fused, lane-dense QKV projection: one matmul instead of 3*heads narrow ones.
    qkv = jnp.dot(xn.astype(wdt), wqkv_ref[0],
                  preferred_element_type=jnp.float32)                     # (Bc*N, 3*inner)
    q_all = qkv[:, 0 * inner:1 * inner].reshape(Bc, N, inner)
    k_all = qkv[:, 1 * inner:2 * inner].reshape(Bc, N, inner)
    v_all = qkv[:, 2 * inner:3 * inner].reshape(Bc, N, inner)

    # Per-head attention (static unrolled loop; each einsum batched over the chunk).
    head_outs = []
    for h in range(heads):
        sl = slice(h * dim_head, (h + 1) * dim_head)
        qh, kh, vh = q_all[:, :, sl], k_all[:, :, sl], v_all[:, :, sl]    # (Bc, N, dh)
        dots = jnp.einsum('bne,bme->bnm', qh, kh,
                          preferred_element_type=jnp.float32) * scale     # (Bc, N, N)
        m = jnp.max(dots, axis=-1, keepdims=True)
        e = jnp.exp(dots - m)
        p = e * pl.reciprocal(jnp.sum(e, axis=-1, keepdims=True), approx=approx_recip)
        head_outs.append(jnp.einsum('bnm,bme->bne', p, vh,
                                    preferred_element_type=jnp.float32))  # (Bc, N, dh)
    attn_out = jnp.concatenate(head_outs, axis=-1).reshape(Bc * N, inner)

    # Single (Bc*N, inner) @ (inner, D) output projection (== concat-heads @ W_out).
    x = x + jnp.dot(attn_out.astype(wdt), wout_ref[0],
                    preferred_element_type=jnp.float32) + bout_ref[0, 0]

    # ---------------- PreNorm + FeedForward + residual ----------------
    xn = _layernorm(x, ln2_g_ref[0, 0], ln2_b_ref[0, 0])
    hid = jnp.dot(xn.astype(wdt), w1_ref[0],
                  preferred_element_type=jnp.float32) + b1_ref[0, 0]
    hid = _gelu_exact(hid)
    x = x + jnp.dot(hid.astype(wdt), w2_ref[0],
                    preferred_element_type=jnp.float32) + b2_ref[0, 0]

    x3 = x.reshape(Bc, N, D)
    acc_ref[...] = x3.astype(acc_ref.dtype)

    if scratch:  # separate scratch accumulator -> copy to output on the last layer only
        @pl.when(l == n_layers - 1)
        def _():
            o_ref[...] = x3.astype(o_ref.dtype)


# ---------------------------------------------------------------------------
# wrapper: stacks per-layer weights (host side, once) and calls pallas_call
# ---------------------------------------------------------------------------
def _auto_batch_chunk(B, N):
    # Aim for >= ~256 matmul rows per grid step, but keep >= 2 chunks on the
    # "parallel" axis so both TensorCores (v7x) can be used.
    target = max(1, 256 // max(N, 1))
    cands = [c for c in range(1, B + 1)
             if B % c == 0 and c <= target and (B // c >= 2 or B == 1)]
    return max(cands) if cands else 1


def transformer_forward(x, params, heads, dim_head, mlp_dim, *,
                        batch_chunk=None, param_dtype=jnp.float32,
                        approx_softmax=False):
    B, N, D = x.shape
    depth = len(params["layers"])
    inner = heads * dim_head

    Bc = batch_chunk if batch_chunk is not None else _auto_batch_chunk(B, N)
    assert B % Bc == 0, "batch must be divisible by batch_chunk"

    def stack(fn, dtype=None):
        w = jnp.stack([fn(L) for L in params["layers"]], axis=0)
        return w.astype(dtype) if dtype is not None else w

    # Big matmul weights optionally in bf16 (param_dtype); LN params / biases stay f32.
    wqkv = stack(lambda L: L["attn"]["w_qkv"], param_dtype)   # (depth, D, 3*inner) fused
    wout = stack(lambda L: L["attn"]["w_out"], param_dtype)   # (depth, inner, D)
    bout = stack(lambda L: L["attn"]["b_out"])                # (depth, 1, D)
    ln1g = stack(lambda L: L["attn"]["ln_g"])                 # (depth, 1, D)
    ln1b = stack(lambda L: L["attn"]["ln_b"])
    ln2g = stack(lambda L: L["ffn"]["ln_g"])
    ln2b = stack(lambda L: L["ffn"]["ln_b"])
    w1 = stack(lambda L: L["ffn"]["w1"], param_dtype)         # (depth, D, mlp_dim)
    b1 = stack(lambda L: L["ffn"]["b1"])                      # (depth, 1, mlp_dim)
    w2 = stack(lambda L: L["ffn"]["w2"], param_dtype)         # (depth, mlp_dim, D)
    b2 = stack(lambda L: L["ffn"]["b2"])

    # VMEM budget: double-buffered per-layer weights + activations + I/O blocks.
    w_itemsize = jnp.dtype(param_dtype).itemsize
    per_layer_w = (D * 3 * inner + inner * D + 2 * D * mlp_dim) * w_itemsize \
                  + (6 * D + mlp_dim) * 4
    act_bytes = Bc * N * (3 * D + 3 * inner + mlp_dim + N) * 4
    io_bytes = 4 * Bc * N * D * x.dtype.itemsize
    try:
        vmem_cap = pltpu.get_tpu_info().vmem_capacity_bytes
    except Exception:
        vmem_cap = 64 * 1024 * 1024  # conservative (v7x per-TC VMEM)
    need = 2 * per_layer_w + act_bytes + io_bytes
    vmem_limit = int(max(32 << 20, min(2 * need, vmem_cap - (8 << 20))))
    # TODO(synk): at production sizes on v7x (64 MiB VMEM), use param_dtype=bf16 and/or
    #             tile w1/w2 along mlp_dim if the double-buffered weights approach the cap.

    use_scratch = (x.dtype != jnp.float32)
    scratch_shapes = [pltpu.VMEM((Bc, N, D), jnp.float32)] if use_scratch else []

    kernel = functools.partial(transformer_stack_kernel, heads=heads,
                               dim_head=dim_head, approx_recip=approx_softmax)

    per_layer = lambda b, l: (l, 0, 0)
    per_chunk = lambda b, l: (b, 0, 0)

    return pl.pallas_call(
        kernel,
        out_shape=jax.ShapeDtypeStruct((B, N, D), x.dtype),
        grid=(B // Bc, depth),            # depth last -> activation stays VMEM-resident
        in_specs=[
            pl.BlockSpec((Bc, N, D), per_chunk),               # x
            pl.BlockSpec((1, 1, D), per_layer),                # ln1_g
            pl.BlockSpec((1, 1, D), per_layer),                # ln1_b
            pl.BlockSpec((1, D, 3 * inner), per_layer),        # w_qkv (fused)
            pl.BlockSpec((1, inner, D), per_layer),            # w_out
            pl.BlockSpec((1, 1, D), per_layer),                # b_out
            pl.BlockSpec((1, 1, D), per_layer),                # ln2_g
            pl.BlockSpec((1, 1, D), per_layer),                # ln2_b
            pl.BlockSpec((1, D, mlp_dim), per_layer),          # w1
            pl.BlockSpec((1, 1, mlp_dim), per_layer),          # b1
            pl.BlockSpec((1, mlp_dim, D), per_layer),          # w2
            pl.BlockSpec((1, 1, D), per_layer),                # b2
        ],
        out_specs=pl.BlockSpec((Bc, N, D), per_chunk),
        scratch_shapes=scratch_shapes,
        compiler_params=pltpu.CompilerParams(
            dimension_semantics=("parallel", "arbitrary"),
            vmem_limit_bytes=vmem_limit),
    )(x, ln1g, ln1b, wqkv, wout, bout, ln2g, ln2b, w1, b1, w2, b2)


# ---------------------------------------------------------------------------
# deterministic parameter construction (synthetic, not a checkpoint load)
# ---------------------------------------------------------------------------
def init_params(key, dim, depth, heads, dim_head, mlp_dim):
    inner = heads * dim_head
    layers = []
    for _ in range(depth):
        key, k1, k2, k3, k4, k5, k6 = jax.random.split(key, 7)
        attn = {
            "ln_g": jnp.ones((1, dim), jnp.float32),
            "ln_b": jnp.zeros((1, dim), jnp.float32),
            "w_qkv": 0.05 * jax.random.normal(k1, (dim, 3 * inner), jnp.float32),
            "w_out": 0.05 * jax.random.normal(k2, (inner, dim), jnp.float32),
            "b_out": 0.05 * jax.random.normal(k3, (1, dim), jnp.float32),
        }
        ffn = {
            "ln_g": jnp.ones((1, dim), jnp.float32),
            "ln_b": jnp.zeros((1, dim), jnp.float32),
            "w1": 0.05 * jax.random.normal(k4, (dim, mlp_dim), jnp.float32),
            "b1": 0.05 * jax.random.normal(k5, (1, mlp_dim), jnp.float32),
            "w2": 0.05 * jax.random.normal(k6, (mlp_dim, dim), jnp.float32),
            "b2": jnp.zeros((1, dim), jnp.float32),
        }
        layers.append({"attn": attn, "ffn": ffn})
    return {"layers": layers}


# ---------------------------------------------------------------------------
# pure-JAX reference (correctness check)
# ---------------------------------------------------------------------------
def ref_forward(x, params, heads, dim_head, mlp_dim):
    def ln(v, g, b):
        mu = jnp.mean(v, axis=-1, keepdims=True)
        var = jnp.mean((v - mu) ** 2, axis=-1, keepdims=True)
        return (v - mu) / jnp.sqrt(var + EPS) * g + b

    inner = heads * dim_head
    scale = dim_head ** -0.5
    B, N, D = x.shape
    for layer in params["layers"]:
        a = layer["attn"]
        xn = ln(x, a["ln_g"][0], a["ln_b"][0])
        qkv = xn @ a["w_qkv"]
        q, k, v = jnp.split(qkv, 3, axis=-1)
        q = q.reshape(B, N, heads, dim_head).transpose(0, 2, 1, 3)
        k = k.reshape(B, N, heads, dim_head).transpose(0, 2, 1, 3)
        v = v.reshape(B, N, heads, dim_head).transpose(0, 2, 1, 3)
        dots = jnp.einsum("bhnd,bhmd->bhnm", q, k) * scale
        attn = jax.nn.softmax(dots, axis=-1)
        o = jnp.einsum("bhnm,bhmd->bhnd", attn, v)
        o = o.transpose(0, 2, 1, 3).reshape(B, N, inner)
        x = o @ a["w_out"] + a["b_out"][0] + x

        f = layer["ffn"]
        xn = ln(x, f["ln_g"][0], f["ln_b"][0])
        h = xn @ f["w1"] + f["b1"][0]
        h = 0.5 * h * (1.0 + jax.lax.erf(h * (2.0 ** -0.5)))
        x = h @ f["w2"] + f["b2"][0] + x
    return x


# ---------------------------------------------------------------------------
if __name__ == "__main__":
    dim, depth, heads, dim_head, mlp_dim = 32, 2, 4, 8, 64
    B, N = 4, 8   # B=4 -> auto batch_chunk=2: exercises the chunked path + 2 parallel chunks

    key = jax.random.PRNGKey(0)
    kx, kp = jax.random.split(key)
    x = jax.random.normal(kx, (B, N, dim), jnp.float32)
    params = init_params(kp, dim, depth, heads, dim_head, mlp_dim)

    out = transformer_forward(x, params, heads, dim_head, mlp_dim)
    out = jax.block_until_ready(out)

    ref = ref_forward(x, params, heads, dim_head, mlp_dim)
    assert out.shape == (B, N, dim)
    assert jnp.allclose(out, ref, atol=1e-4, rtol=1e-4), "Pallas output mismatch vs JAX reference"

    print("KERNEL_OK")
</pallas_src>

<mosaic_0001>
module attributes {stable_mosaic.version = 11 : i64} {
  func.func @transformer_stack_kernel(%arg0: i32, %arg1: i32, %arg2: memref<2x8x32xf32, #tpu.memory_space<vmem>>, %arg3: memref<1x1x32xf32, #tpu.memory_space<vmem>>, %arg4: memref<1x1x32xf32, #tpu.memory_space<vmem>>, %arg5: memref<1x32x96xf32, #tpu.memory_space<vmem>>, %arg6: memref<1x32x32xf32, #tpu.memory_space<vmem>>, %arg7: memref<1x1x32xf32, #tpu.memory_space<vmem>>, %arg8: memref<1x1x32xf32, #tpu.memory_space<vmem>>, %arg9: memref<1x1x32xf32, #tpu.memory_space<vmem>>, %arg10: memref<1x32x64xf32, #tpu.memory_space<vmem>>, %arg11: memref<1x1x64xf32, #tpu.memory_space<vmem>>, %arg12: memref<1x64x32xf32, #tpu.memory_space<vmem>>, %arg13: memref<1x1x32xf32, #tpu.memory_space<vmem>>, %arg14: memref<2x8x32xf32, #tpu.memory_space<vmem>>) attributes {dimension_semantics = [#tpu.dimension_semantics<parallel>, #tpu.dimension_semantics<arbitrary>], iteration_bounds = array<i64: 2, 2>, scalar_prefetch = 0 : i64, scratch_operands = 0 : i64, tpu.core_type = #tpu.core_type<tc>, window_params = [{transform_indices = @transform_0, window_bounds = array<i64: 2, 8, 32>}, {transform_indices = @transform_1, window_bounds = array<i64: 1, 1, 32>}, {transform_indices = @transform_2, window_bounds = array<i64: 1, 1, 32>}, {transform_indices = @transform_3, window_bounds = array<i64: 1, 32, 96>}, {transform_indices = @transform_4, window_bounds = array<i64: 1, 32, 32>}, {transform_indices = @transform_5, window_bounds = array<i64: 1, 1, 32>}, {transform_indices = @transform_6, window_bounds = array<i64: 1, 1, 32>}, {transform_indices = @transform_7, window_bounds = array<i64: 1, 1, 32>}, {transform_indices = @transform_8, window_bounds = array<i64: 1, 32, 64>}, {transform_indices = @transform_9, window_bounds = array<i64: 1, 1, 64>}, {transform_indices = @transform_10, window_bounds = array<i64: 1, 64, 32>}, {transform_indices = @transform_11, window_bounds = array<i64: 1, 1, 32>}, {transform_indices = @transform_12, window_bounds = array<i64: 2, 8, 32>}]} {
    %c0_i32 = arith.constant 0 : i32
    %0 = arith.cmpi eq, %arg1, %c0_i32 : i32
    %1 = arith.extui %0 : i1 to i32
    %c0_i32_0 = arith.constant 0 : i32
    %2 = arith.cmpi ne, %1, %c0_i32_0 : i32
    scf.if %2 {
      %c0_75 = arith.constant 0 : index
      %c0_76 = arith.constant 0 : index
      %c0_77 = arith.constant 0 : index
      %176 = vector.load %arg2[%c0_75, %c0_76, %c0_77] : memref<2x8x32xf32, #tpu.memory_space<vmem>>, vector<2x8x32xf32>
      %c0_78 = arith.constant 0 : index
      %c0_79 = arith.constant 0 : index
      %c0_80 = arith.constant 0 : index
      %177 = vector.load %arg14[%c0_78, %c0_79, %c0_80] : memref<2x8x32xf32, #tpu.memory_space<vmem>>, vector<2x8x32xf32>
      tpu.vector_store %arg14[%c0_78, %c0_79, %c0_80], %176 {strides = array<i32>} : memref<2x8x32xf32, #tpu.memory_space<vmem>>, vector<2x8x32xf32>,
    } else {
    }
    %c0 = arith.constant 0 : index
    %c0_1 = arith.constant 0 : index
    %c0_2 = arith.constant 0 : index
    %3 = vector.load %arg14[%c0, %c0_1, %c0_2] : memref<2x8x32xf32, #tpu.memory_space<vmem>>, vector<2x8x32xf32>
    %4 = vector.shape_cast %3 : vector<2x8x32xf32> to vector<16x32xf32>
    %c0_3 = arith.constant 0 : index
    %c0_4 = arith.constant 0 : index
    %c0_5 = arith.constant 0 : index
    %5 = vector.load %arg3[%c0_3, %c0_4, %c0_5] : memref<1x1x32xf32, #tpu.memory_space<vmem>>, vector<1x1x32xf32>
    %6 = vector.shape_cast %5 : vector<1x1x32xf32> to vector<32xf32>
    %c0_6 = arith.constant 0 : index
    %c0_7 = arith.constant 0 : index
    %c0_8 = arith.constant 0 : index
    %7 = vector.load %arg4[%c0_6, %c0_7, %c0_8] : memref<1x1x32xf32, #tpu.memory_space<vmem>>, vector<1x1x32xf32>
    %8 = vector.shape_cast %7 : vector<1x1x32xf32> to vector<32xf32>
    %cst = arith.constant dense<0.000000e+00> : vector<16xf32>
    %9 = vector.multi_reduction <add>, %4, %cst [1] : vector<16x32xf32> to vector<16xf32>
    %10 = vector.shape_cast %9 : vector<16xf32> to vector<16x1xf32>
    %cst_9 = arith.constant 3.200000e+01 : f32
    %11 = vector.broadcast %cst_9 : f32 to vector<16x1xf32>
    %12 = arith.divf %10, %11 : vector<16x1xf32>
    %13 = vector.broadcast %12 : vector<16x1xf32> to vector<16x32xf32>
    %14 = arith.subf %4, %13 : vector<16x32xf32>
    %15 = arith.mulf %14, %14 : vector<16x32xf32>
    %cst_10 = arith.constant dense<0.000000e+00> : vector<16xf32>
    %16 = vector.multi_reduction <add>, %15, %cst_10 [1] : vector<16x32xf32> to vector<16xf32>
    %17 = vector.shape_cast %16 : vector<16xf32> to vector<16x1xf32>
    %cst_11 = arith.constant 3.200000e+01 : f32
    %18 = vector.broadcast %cst_11 : f32 to vector<16x1xf32>
    %19 = arith.divf %17, %18 : vector<16x1xf32>
    %20 = vector.broadcast %12 : vector<16x1xf32> to vector<16x32xf32>
    %21 = arith.subf %4, %20 : vector<16x32xf32>
    %cst_12 = arith.constant 9.99999974E-6 : f32
    %22 = vector.broadcast %cst_12 : f32 to vector<16x1xf32>
    %23 = arith.addf %19, %22 : vector<16x1xf32>
    %24 = math.rsqrt %23 : vector<16x1xf32>
    %25 = vector.broadcast %24 : vector<16x1xf32> to vector<16x32xf32>
    %26 = arith.mulf %21, %25 : vector<16x32xf32>
    %27 = vector.shape_cast %6 : vector<32xf32> to vector<1x32xf32>
    %28 = vector.broadcast %27 : vector<1x32xf32> to vector<16x32xf32>
    %29 = arith.mulf %26, %28 : vector<16x32xf32>
    %30 = vector.shape_cast %8 : vector<32xf32> to vector<1x32xf32>
    %31 = vector.broadcast %30 : vector<1x32xf32> to vector<16x32xf32>
    %32 = arith.addf %29, %31 : vector<16x32xf32>
    %c0_13 = arith.constant 0 : index
    %c0_14 = arith.constant 0 : index
    %c0_15 = arith.constant 0 : index
    %33 = vector.load %arg5[%c0_13, %c0_14, %c0_15] : memref<1x32x96xf32, #tpu.memory_space<vmem>>, vector<1x32x96xf32>
    %34 = vector.shape_cast %33 : vector<1x32x96xf32> to vector<32x96xf32>
    %cst_16 = arith.constant dense<0.000000e+00> : vector<16x96xf32>
    %35 = tpu.matmul %32, %34, %cst_16 {dimension_numbers = #tpu.dot_dimension_numbers<[1], [0], [0], [1], [0, 0, 1, 1], [], []>} : vector<16x32xf32>, vector<32x96xf32>, vector<16x96xf32> -> vector<16x96xf32>
    %36 = vector.extract_strided_slice %35 {offsets = [0, 0], sizes = [16, 32], strides = [1, 1]} : vector<16x96xf32> to vector<16x32xf32>
    %37 = vector.shape_cast %36 : vector<16x32xf32> to vector<2x8x32xf32>
    %38 = vector.extract_strided_slice %35 {offsets = [0, 32], sizes = [16, 32], strides = [1, 1]} : vector<16x96xf32> to vector<16x32xf32>
    %39 = vector.shape_cast %38 : vector<16x32xf32> to vector<2x8x32xf32>
    %40 = vector.extract_strided_slice %35 {offsets = [0, 64], sizes = [16, 32], strides = [1, 1]} : vector<16x96xf32> to vector<16x32xf32>
    %41 = vector.shape_cast %40 : vector<16x32xf32> to vector<2x8x32xf32>
    %42 = vector.extract_strided_slice %37 {offsets = [0, 0, 0], sizes = [2, 8, 8], strides = [1, 1, 1]} : vector<2x8x32xf32> to vector<2x8x8xf32>
    %43 = vector.extract_strided_slice %39 {offsets = [0, 0, 0], sizes = [2, 8, 8], strides = [1, 1, 1]} : vector<2x8x32xf32> to vector<2x8x8xf32>
    %44 = vector.extract_strided_slice %41 {offsets = [0, 0, 0], sizes = [2, 8, 8], strides = [1, 1, 1]} : vector<2x8x32xf32> to vector<2x8x8xf32>
    "tpu.trace_start"() <{level = 10 : i32, message = "bne,bme->bnm"}> : () -> ()
    %cst_17 = arith.constant dense<0.000000e+00> : vector<2x8x8xf32>
    %45 = tpu.matmul %42, %43, %cst_17 {dimension_numbers = #tpu.dot_dimension_numbers<[2], [2], [1], [1], [0, 0, 0, 1, 1, 1], [0], [0]>} : vector<2x8x8xf32>, vector<2x8x8xf32>, vector<2x8x8xf32> -> vector<2x8x8xf32>
    "tpu.trace_stop"() : () -> ()
    %cst_18 = arith.constant 0.353553385 : f32
    %46 = vector.broadcast %cst_18 : f32 to vector<2x8x8xf32>
    %47 = arith.mulf %45, %46 : vector<2x8x8xf32>
    %cst_19 = arith.constant dense<0xFF800000> : vector<2x8xf32>
    %48 = vector.multi_reduction <maximumf>, %47, %cst_19 [2] : vector<2x8x8xf32> to vector<2x8xf32>
    %49 = vector.shape_cast %48 : vector<2x8xf32> to vector<2x8x1xf32>
    %50 = vector.broadcast %49 : vector<2x8x1xf32> to vector<2x8x8xf32>
    %51 = arith.subf %47, %50 : vector<2x8x8xf32>
    %52 = math.exp %51 : vector<2x8x8xf32>
    %cst_20 = arith.constant dense<0.000000e+00> : vector<2x8xf32>
    %53 = vector.multi_reduction <add>, %52, %cst_20 [2] : vector<2x8x8xf32> to vector<2x8xf32>
    %54 = vector.shape_cast %53 : vector<2x8xf32> to vector<2x8x1xf32>
    %55 = tpu.reciprocal %54 : vector<2x8x1xf32> -> vector<2x8x1xf32>
    %56 = vector.broadcast %55 : vector<2x8x1xf32> to vector<2x8x8xf32>
    %57 = arith.mulf %52, %56 : vector<2x8x8xf32>
    "tpu.trace_start"() <{level = 10 : i32, message = "bnm,bme->bne"}> : () -> ()
    %cst_21 = arith.constant dense<0.000000e+00> : vector<2x8x8xf32>
    %58 = tpu.matmul %57, %44, %cst_21 {dimension_numbers = #tpu.dot_dimension_numbers<[2], [1], [1], [2], [0, 0, 0, 1, 1, 2], [0], [0]>} : vector<2x8x8xf32>, vector<2x8x8xf32>, vector<2x8x8xf32> -> vector<2x8x8xf32>
    "tpu.trace_stop"() : () -> ()
    %59 = vector.extract_strided_slice %37 {offsets = [0, 0, 8], sizes = [2, 8, 8], strides = [1, 1, 1]} : vector<2x8x32xf32> to vector<2x8x8xf32>
    %60 = vector.extract_strided_slice %39 {offsets = [0, 0, 8], sizes = [2, 8, 8], strides = [1, 1, 1]} : vector<2x8x32xf32> to vector<2x8x8xf32>
    %61 = vector.extract_strided_slice %41 {offsets = [0, 0, 8], sizes = [2, 8, 8], strides = [1, 1, 1]} : vector<2x8x32xf32> to vector<2x8x8xf32>
    "tpu.trace_start"() <{level = 10 : i32, message = "bne,bme->bnm"}> : () -> ()
    %cst_22 = arith.constant dense<0.000000e+00> : vector<2x8x8xf32>
    %62 = tpu.matmul %59, %60, %cst_22 {dimension_numbers = #tpu.dot_dimension_numbers<[2], [2], [1], [1], [0, 0, 0, 1, 1, 1], [0], [0]>} : vector<2x8x8xf32>, vector<2x8x8xf32>, vector<2x8x8xf32> -> vector<2x8x8xf32>
    "tpu.trace_stop"() : () -> ()
    %cst_23 = arith.constant 0.353553385 : f32
    %63 = vector.broadcast %cst_23 : f32 to vector<2x8x8xf32>
    %64 = arith.mulf %62, %63 : vector<2x8x8xf32>
    %cst_24 = arith.constant dense<0xFF800000> : vector<2x8xf32>
    %65 = vector.multi_reduction <maximumf>, %64, %cst_24 [2] : vector<2x8x8xf32> to vector<2x8xf32>
    %66 = vector.shape_cast %65 : vector<2x8xf32> to vector<2x8x1xf32>
    %67 = vector.broadcast %66 : vector<2x8x1xf32> to vector<2x8x8xf32>
    %68 = arith.subf %64, %67 : vector<2x8x8xf32>
    %69 = math.exp %68 : vector<2x8x8xf32>
    %cst_25 = arith.constant dense<0.000000e+00> : vector<2x8xf32>
    %70 = vector.multi_reduction <add>, %69, %cst_25 [2] : vector<2x8x8xf32> to vector<2x8xf32>
    %71 = vector.shape_cast %70 : vector<2x8xf32> to vector<2x8x1xf32>
    %72 = tpu.reciprocal %71 : vector<2x8x1xf32> -> vector<2x8x1xf32>
    %73 = vector.broadcast %72 : vector<2x8x1xf32> to vector<2x8x8xf32>
    %74 = arith.mulf %69, %73 : vector<2x8x8xf32>
    "tpu.trace_start"() <{level = 10 : i32, message = "bnm,bme->bne"}> : () -> ()
    %cst_26 = arith.constant dense<0.000000e+00> : vector<2x8x8xf32>
    %75 = tpu.matmul %74, %61, %cst_26 {dimension_numbers = #tpu.dot_dimension_numbers<[2], [1], [1], [2], [0, 0, 0, 1, 1, 2], [0], [0]>} : vector<2x8x8xf32>, vector<2x8x8xf32>, vector<2x8x8xf32> -> vector<2x8x8xf32>
    "tpu.trace_stop"() : () -> ()
    %76 = vector.extract_strided_slice %37 {offsets = [0, 0, 16], sizes = [2, 8, 8], strides = [1, 1, 1]} : vector<2x8x32xf32> to vector<2x8x8xf32>
    %77 = vector.extract_strided_slice %39 {offsets = [0, 0, 16], sizes = [2, 8, 8], strides = [1, 1, 1]} : vector<2x8x32xf32> to vector<2x8x8xf32>
    %78 = vector.extract_strided_slice %41 {offsets = [0, 0, 16], sizes = [2, 8, 8], strides = [1, 1, 1]} : vector<2x8x32xf32> to vector<2x8x8xf32>
    "tpu.trace_start"() <{level = 10 : i32, message = "bne,bme->bnm"}> : () -> ()
    %cst_27 = arith.constant dense<0.000000e+00> : vector<2x8x8xf32>
    %79 = tpu.matmul %76, %77, %cst_27 {dimension_numbers = #tpu.dot_dimension_numbers<[2], [2], [1], [1], [0, 0, 0, 1, 1, 1], [0], [0]>} : vector<2x8x8xf32>, vector<2x8x8xf32>, vector<2x8x8xf32> -> vector<2x8x8xf32>
    "tpu.trace_stop"() : () -> ()
    %cst_28 = arith.constant 0.353553385 : f32
    %80 = vector.broadcast %cst_28 : f32 to vector<2x8x8xf32>
    %81 = arith.mulf %79, %80 : vector<2x8x8xf32>
    %cst_29 = arith.constant dense<0xFF800000> : vector<2x8xf32>
    %82 = vector.multi_reduction <maximumf>, %81, %cst_29 [2] : vector<2x8x8xf32> to vector<2x8xf32>
    %83 = vector.shape_cast %82 : vector<2x8xf32> to vector<2x8x1xf32>
    %84 = vector.broadcast %83 : vector<2x8x1xf32> to vector<2x8x8xf32>
    %85 = arith.subf %81, %84 : vector<2x8x8xf32>
    %86 = math.exp %85 : vector<2x8x8xf32>
    %cst_30 = arith.constant dense<0.000000e+00> : vector<2x8xf32>
    %87 = vector.multi_reduction <add>, %86, %cst_30 [2] : vector<2x8x8xf32> to vector<2x8xf32>
    %88 = vector.shape_cast %87 : vector<2x8xf32> to vector<2x8x1xf32>
    %89 = tpu.reciprocal %88 : vector<2x8x1xf32> -> vector<2x8x1xf32>
    %90 = vector.broadcast %89 : vector<2x8x1xf32> to vector<2x8x8xf32>
    %91 = arith.mulf %86, %90 : vector<2x8x8xf32>
    "tpu.trace_start"() <{level = 10 : i32, message = "bnm,bme->bne"}> : () -> ()
    %cst_31 = arith.constant dense<0.000000e+00> : vector<2x8x8xf32>
    %92 = tpu.matmul %91, %78, %cst_31 {dimension_numbers = #tpu.dot_dimension_numbers<[2], [1], [1], [2], [0, 0, 0, 1, 1, 2], [0], [0]>} : vector<2x8x8xf32>, vector<2x8x8xf32>, vector<2x8x8xf32> -> vector<2x8x8xf32>
    "tpu.trace_stop"() : () -> ()
    %93 = vector.extract_strided_slice %37 {offsets = [0, 0, 24], sizes = [2, 8, 8], strides = [1, 1, 1]} : vector<2x8x32xf32> to vector<2x8x8xf32>
    %94 = vector.extract_strided_slice %39 {offsets = [0, 0, 24], sizes = [2, 8, 8], strides = [1, 1, 1]} : vector<2x8x32xf32> to vector<2x8x8xf32>
    %95 = vector.extract_strided_slice %41 {offsets = [0, 0, 24], sizes = [2, 8, 8], strides = [1, 1, 1]} : vector<2x8x32xf32> to vector<2x8x8xf32>
    "tpu.trace_start"() <{level = 10 : i32, message = "bne,bme->bnm"}> : () -> ()
    %cst_32 = arith.constant dense<0.000000e+00> : vector<2x8x8xf32>
    %96 = tpu.matmul %93, %94, %cst_32 {dimension_numbers = #tpu.dot_dimension_numbers<[2], [2], [1], [1], [0, 0, 0, 1, 1, 1], [0], [0]>} : vector<2x8x8xf32>, vector<2x8x8xf32>, vector<2x8x8xf32> -> vector<2x8x8xf32>
    "tpu.trace_stop"() : () -> ()
    %cst_33 = arith.constant 0.353553385 : f32
    %97 = vector.broadcast %cst_33 : f32 to vector<2x8x8xf32>
    %98 = arith.mulf %96, %97 : vector<2x8x8xf32>
    %cst_34 = arith.constant dense<0xFF800000> : vector<2x8xf32>
    %99 = vector.multi_reduction <maximumf>, %98, %cst_34 [2] : vector<2x8x8xf32> to vector<2x8xf32>
    %100 = vector.shape_cast %99 : vector<2x8xf32> to vector<2x8x1xf32>
    %101 = vector.broadcast %100 : vector<2x8x1xf32> to vector<2x8x8xf32>
    %102 = arith.subf %98, %101 : vector<2x8x8xf32>
    %103 = math.exp %102 : vector<2x8x8xf32>
    %cst_35 = arith.constant dense<0.000000e+00> : vector<2x8xf32>
    %104 = vector.multi_reduction <add>, %103, %cst_35 [2] : vector<2x8x8xf32> to vector<2x8xf32>
    %105 = vector.shape_cast %104 : vector<2x8xf32> to vector<2x8x1xf32>
    %106 = tpu.reciprocal %105 : vector<2x8x1xf32> -> vector<2x8x1xf32>
    %107 = vector.broadcast %106 : vector<2x8x1xf32> to vector<2x8x8xf32>
    %108 = arith.mulf %103, %107 : vector<2x8x8xf32>
    "tpu.trace_start"() <{level = 10 : i32, message = "bnm,bme->bne"}> : () -> ()
    %cst_36 = arith.constant dense<0.000000e+00> : vector<2x8x8xf32>
    %109 = tpu.matmul %108, %95, %cst_36 {dimension_numbers = #tpu.dot_dimension_numbers<[2], [1], [1], [2], [0, 0, 0, 1, 1, 2], [0], [0]>} : vector<2x8x8xf32>, vector<2x8x8xf32>, vector<2x8x8xf32> -> vector<2x8x8xf32>
    "tpu.trace_stop"() : () -> ()
    %110 = tpu.concatenate %58, %75, %92, %109 in 2 : vector<2x8x8xf32>, vector<2x8x8xf32>, vector<2x8x8xf32>, vector<2x8x8xf32> -> vector<2x8x32xf32>
    %111 = vector.shape_cast %110 : vector<2x8x32xf32> to vector<16x32xf32>
    %c0_37 = arith.constant 0 : index
    %c0_38 = arith.constant 0 : index
    %c0_39 = arith.constant 0 : index
    %112 = vector.load %arg6[%c0_37, %c0_38, %c0_39] : memref<1x32x32xf32, #tpu.memory_space<vmem>>, vector<1x32x32xf32>
    %113 = vector.shape_cast %112 : vector<1x32x32xf32> to vector<32x32xf32>
    %cst_40 = arith.constant dense<0.000000e+00> : vector<16x32xf32>
    %114 = tpu.matmul %111, %113, %cst_40 {dimension_numbers = #tpu.dot_dimension_numbers<[1], [0], [0], [1], [0, 0, 1, 1], [], []>} : vector<16x32xf32>, vector<32x32xf32>, vector<16x32xf32> -> vector<16x32xf32>
    %115 = arith.addf %4, %114 : vector<16x32xf32>
    %c0_41 = arith.constant 0 : index
    %c0_42 = arith.constant 0 : index
    %c0_43 = arith.constant 0 : index
    %116 = vector.load %arg7[%c0_41, %c0_42, %c0_43] : memref<1x1x32xf32, #tpu.memory_space<vmem>>, vector<1x1x32xf32>
    %117 = vector.shape_cast %116 : vector<1x1x32xf32> to vector<32xf32>
    %118 = vector.shape_cast %117 : vector<32xf32> to vector<1x32xf32>
    %119 = vector.broadcast %118 : vector<1x32xf32> to vector<16x32xf32>
    %120 = arith.addf %115, %119 : vector<16x32xf32>
    %c0_44 = arith.constant 0 : index
    %c0_45 = arith.constant 0 : index
    %c0_46 = arith.constant 0 : index
    %121 = vector.load %arg8[%c0_44, %c0_45, %c0_46] : memref<1x1x32xf32, #tpu.memory_space<vmem>>, vector<1x1x32xf32>
    %122 = vector.shape_cast %121 : vector<1x1x32xf32> to vector<32xf32>
    %c0_47 = arith.constant 0 : index
    %c0_48 = arith.constant 0 : index
    %c0_49 = arith.constant 0 : index
    %123 = vector.load %arg9[%c0_47, %c0_48, %c0_49] : memref<1x1x32xf32, #tpu.memory_space<vmem>>, vector<1x1x32xf32>
    %124 = vector.shape_cast %123 : vector<1x1x32xf32> to vector<32xf32>
    %cst_50 = arith.constant dense<0.000000e+00> : vector<16xf32>
    %125 = vector.multi_reduction <add>, %120, %cst_50 [1] : vector<16x32xf32> to vector<16xf32>
    %126 = vector.shape_cast %125 : vector<16xf32> to vector<16x1xf32>
    %cst_51 = arith.constant 3.200000e+01 : f32
    %127 = vector.broadcast %cst_51 : f32 to vector<16x1xf32>
    %128 = arith.divf %126, %127 : vector<16x1xf32>
    %129 = vector.broadcast %128 : vector<16x1xf32> to vector<16x32xf32>
    %130 = arith.subf %120, %129 : vector<16x32xf32>
    %131 = arith.mulf %130, %130 : vector<16x32xf32>
    %cst_52 = arith.constant dense<0.000000e+00> : vector<16xf32>
    %132 = vector.multi_reduction <add>, %131, %cst_52 [1] : vector<16x32xf32> to vector<16xf32>
    %133 = vector.shape_cast %132 : vector<16xf32> to vector<16x1xf32>
    %cst_53 = arith.constant 3.200000e+01 : f32
    %134 = vector.broadcast %cst_53 : f32 to vector<16x1xf32>
    %135 = arith.divf %133, %134 : vector<16x1xf32>
    %136 = vector.broadcast %128 : vector<16x1xf32> to vector<16x32xf32>
    %137 = arith.subf %120, %136 : vector<16x32xf32>
    %cst_54 = arith.constant 9.99999974E-6 : f32
    %138 = vector.broadcast %cst_54 : f32 to vector<16x1xf32>
    %139 = arith.addf %135, %138 : vector<16x1xf32>
    %140 = math.rsqrt %139 : vector<16x1xf32>
    %141 = vector.broadcast %140 : vector<16x1xf32> to vector<16x32xf32>
    %142 = arith.mulf %137, %141 : vector<16x32xf32>
    %143 = vector.shape_cast %122 : vector<32xf32> to vector<1x32xf32>
    %144 = vector.broadcast %143 : vector<1x32xf32> to vector<16x32xf32>
    %145 = arith.mulf %142, %144 : vector<16x32xf32>
    %146 = vector.shape_cast %124 : vector<32xf32> to vector<1x32xf32>
    %147 = vector.broadcast %146 : vector<1x32xf32> to vector<16x32xf32>
    %148 = arith.addf %145, %147 : vector<16x32xf32>
    %c0_55 = arith.constant 0 : index
    %c0_56 = arith.constant 0 : index
    %c0_57 = arith.constant 0 : index
    %149 = vector.load %arg10[%c0_55, %c0_56, %c0_57] : memref<1x32x64xf32, #tpu.memory_space<vmem>>, vector<1x32x64xf32>
    %150 = vector.shape_cast %149 : vector<1x32x64xf32> to vector<32x64xf32>
    %cst_58 = arith.constant dense<0.000000e+00> : vector<16x64xf32>
    %151 = tpu.matmul %148, %150, %cst_58 {dimension_numbers = #tpu.dot_dimension_numbers<[1], [0], [0], [1], [0, 0, 1, 1], [], []>} : vector<16x32xf32>, vector<32x64xf32>, vector<16x64xf32> -> vector<16x64xf32>
    %c0_59 = arith.constant 0 : index
    %c0_60 = arith.constant 0 : index
    %c0_61 = arith.constant 0 : index
    %152 = vector.load %arg11[%c0_59, %c0_60, %c0_61] : memref<1x1x64xf32, #tpu.memory_space<vmem>>, vector<1x1x64xf32>
    %153 = vector.shape_cast %152 : vector<1x1x64xf32> to vector<64xf32>
    %154 = vector.shape_cast %153 : vector<64xf32> to vector<1x64xf32>
    %155 = vector.broadcast %154 : vector<1x64xf32> to vector<16x64xf32>
    %156 = arith.addf %151, %155 : vector<16x64xf32>
    %cst_62 = arith.constant 5.000000e-01 : f32
    %157 = vector.broadcast %cst_62 : f32 to vector<16x64xf32>
    %158 = arith.mulf %157, %156 : vector<16x64xf32>
    %cst_63 = arith.constant 0.707106769 : f32
    %159 = vector.broadcast %cst_63 : f32 to vector<16x64xf32>
    %160 = arith.mulf %156, %159 : vector<16x64xf32>
    %161 = math.erf %160 : vector<16x64xf32>
    %cst_64 = arith.constant 1.000000e+00 : f32
    %162 = vector.broadcast %cst_64 : f32 to vector<16x64xf32>
    %163 = arith.addf %162, %161 : vector<16x64xf32>
    %164 = arith.mulf %158, %163 : vector<16x64xf32>
    %c0_65 = arith.constant 0 : index
    %c0_66 = arith.constant 0 : index
    %c0_67 = arith.constant 0 : index
    %165 = vector.load %arg12[%c0_65, %c0_66, %c0_67] : memref<1x64x32xf32, #tpu.memory_space<vmem>>, vector<1x64x32xf32>
    %166 = vector.shape_cast %165 : vector<1x64x32xf32> to vector<64x32xf32>
    %cst_68 = arith.constant dense<0.000000e+00> : vector<16x32xf32>
    %167 = tpu.matmul %164, %166, %cst_68 {dimension_numbers = #tpu.dot_dimension_numbers<[1], [0], [0], [1], [0, 0, 1, 1], [], []>} : vector<16x64xf32>, vector<64x32xf32>, vector<16x32xf32> -> vector<16x32xf32>
    %168 = arith.addf %120, %167 : vector<16x32xf32>
    %c0_69 = arith.constant 0 : index
    %c0_70 = arith.constant 0 : index
    %c0_71 = arith.constant 0 : index
    %169 = vector.load %arg13[%c0_69, %c0_70, %c0_71] : memref<1x1x32xf32, #tpu.memory_space<vmem>>, vector<1x1x32xf32>
    %170 = vector.shape_cast %169 : vector<1x1x32xf32> to vector<32xf32>
    %171 = vector.shape_cast %170 : vector<32xf32> to vector<1x32xf32>
    %172 = vector.broadcast %171 : vector<1x32xf32> to vector<16x32xf32>
    %173 = arith.addf %168, %172 : vector<16x32xf32>
    %174 = vector.shape_cast %173 : vector<16x32xf32> to vector<2x8x32xf32>
    %c0_72 = arith.constant 0 : index
    %c0_73 = arith.constant 0 : index
    %c0_74 = arith.constant 0 : index
    %175 = vector.load %arg14[%c0_72, %c0_73, %c0_74] : memref<2x8x32xf32, #tpu.memory_space<vmem>>, vector<2x8x32xf32>
    tpu.vector_store %arg14[%c0_72, %c0_73, %c0_74], %174 {strides = array<i32>} : memref<2x8x32xf32, #tpu.memory_space<vmem>>, vector<2x8x32xf32>,
    return
  }
  func.func @transform_0(%arg0: i32, %arg1: i32) -> (i32, i32, i32) {
    %c0_i32 = arith.constant 0 : i32
    %c0_i32_0 = arith.constant 0 : i32
    %c0_i32_1 = arith.constant 0 : i32
    return %arg0, %c0_i32, %c0_i32_0 : i32, i32, i32
  }
  func.func @transform_1(%arg0: i32, %arg1: i32) -> (i32, i32, i32) {
    %c0_i32 = arith.constant 0 : i32
    %c0_i32_0 = arith.constant 0 : i32
    %c0_i32_1 = arith.constant 0 : i32
    return %arg1, %c0_i32, %c0_i32_0 : i32, i32, i32
  }
  func.func @transform_2(%arg0: i32, %arg1: i32) -> (i32, i32, i32) {
    %c0_i32 = arith.constant 0 : i32
    %c0_i32_0 = arith.constant 0 : i32
    %c0_i32_1 = arith.constant 0 : i32
    return %arg1, %c0_i32, %c0_i32_0 : i32, i32, i32
  }
  func.func @transform_3(%arg0: i32, %arg1: i32) -> (i32, i32, i32) {
    %c0_i32 = arith.constant 0 : i32
    %c0_i32_0 = arith.constant 0 : i32
    %c0_i32_1 = arith.constant 0 : i32
    return %arg1, %c0_i32, %c0_i32_0 : i32, i32, i32
  }
  func.func @transform_4(%arg0: i32, %arg1: i32) -> (i32, i32, i32) {
    %c0_i32 = arith.constant 0 : i32
    %c0_i32_0 = arith.constant 0 : i32
    %c0_i32_1 = arith.constant 0 : i32
    return %arg1, %c0_i32, %c0_i32_0 : i32, i32, i32
  }
  func.func @transform_5(%arg0: i32, %arg1: i32) -> (i32, i32, i32) {
    %c0_i32 = arith.constant 0 : i32
    %c0_i32_0 = arith.constant 0 : i32
    %c0_i32_1 = arith.constant 0 : i32
    return %arg1, %c0_i32, %c0_i32_0 : i32, i32, i32
  }
  func.func @transform_6(%arg0: i32, %arg1: i32) -> (i32, i32, i32) {
    %c0_i32 = arith.constant 0 : i32
    %c0_i32_0 = arith.constant 0 : i32
    %c0_i32_1 = arith.constant 0 : i32
    return %arg1, %c0_i32, %c0_i32_0 : i32, i32, i32
  }
  func.func @transform_7(%arg0: i32, %arg1: i32) -> (i32, i32, i32) {
    %c0_i32 = arith.constant 0 : i32
    %c0_i32_0 = arith.constant 0 : i32
    %c0_i32_1 = arith.constant 0 : i32
    return %arg1, %c0_i32, %c0_i32_0 : i32, i32, i32
  }
  func.func @transform_8(%arg0: i32, %arg1: i32) -> (i32, i32, i32) {
    %c0_i32 = arith.constant 0 : i32
    %c0_i32_0 = arith.constant 0 : i32
    %c0_i32_1 = arith.constant 0 : i32
    return %arg1, %c0_i32, %c0_i32_0 : i32, i32, i32
  }
  func.func @transform_9(%arg0: i32, %arg1: i32) -> (i32, i32, i32) {
    %c0_i32 = arith.constant 0 : i32
    %c0_i32_0 = arith.constant 0 : i32
    %c0_i32_1 = arith.constant 0 : i32
    return %arg1, %c0_i32, %c0_i32_0 : i32, i32, i32
  }
  func.func @transform_10(%arg0: i32, %arg1: i32) -> (i32, i32, i32) {
    %c0_i32 = arith.constant 0 : i32
    %c0_i32_0 = arith.constant 0 : i32
    %c0_i32_1 = arith.constant 0 : i32
    return %arg1, %c0_i32, %c0_i32_0 : i32, i32, i32
  }
  func.func @transform_11(%arg0: i32, %arg1: i32) -> (i32, i32, i32) {
    %c0_i32 = arith.constant 0 : i32
    %c0_i32_0 = arith.constant 0 : i32
    %c0_i32_1 = arith.constant 0 : i32
    return %arg1, %c0_i32, %c0_i32_0 : i32, i32, i32
  }
  func.func @transform_12(%arg0: i32, %arg1: i32) -> (i32, i32, i32) {
    %c0_i32 = arith.constant 0 : i32
    %c0_i32_0 = arith.constant 0 : i32
    %c0_i32_1 = arith.constant 0 : i32
    return %arg0, %c0_i32, %c0_i32_0 : i32, i32, i32
  }
}

</mosaic_0001>

<llo_original>
// kernel: tpu_custom_call.1
$region0: #{tpu_custom_call.1}
  #allocation0 [shape = 'u32[]', space=smem, size = 0x4, offset = 0x4, fixed_abs, tag = 'smem constant byte address 0x4 - core index']
  #allocation1 [shape = 'u32[144,128]{1,0:T(1,128)}', space=vmem, size = 0x12000, scoped, tag = 'internal scratch']
  %s0 = inlined_call_operand.hbm [shape: f32[4,8,32], index: 0, kind: input, shape index: {}]
  %s1 = inlined_call_operand.vmem [shape: f32[2,1,32], index: 1, kind: input, shape index: {}]
  %s2 = inlined_call_operand.vmem [shape: f32[2,1,32], index: 2, kind: input, shape index: {}]
  %s3 = inlined_call_operand.vmem [shape: f32[2,32,96], index: 3, kind: input, shape index: {}]
  %s4 = inlined_call_operand.vmem [shape: f32[2,32,32], index: 4, kind: input, shape index: {}]
  %s5 = inlined_call_operand.vmem [shape: f32[2,1,32], index: 5, kind: input, shape index: {}]
  %s6 = inlined_call_operand.vmem [shape: f32[2,1,32], index: 6, kind: input, shape index: {}]
  %s7 = inlined_call_operand.vmem [shape: f32[2,1,32], index: 7, kind: input, shape index: {}]
  %s8 = inlined_call_operand.vmem [shape: f32[2,32,64], index: 8, kind: input, shape index: {}]
  %s9 = inlined_call_operand.vmem [shape: f32[2,1,64], index: 9, kind: input, shape index: {}]
  %s10 = inlined_call_operand.vmem [shape: f32[2,64,32], index: 10, kind: input, shape index: {}]
  %s11 = inlined_call_operand.vmem [shape: f32[2,1,32], index: 11, kind: input, shape index: {}]
  %s12 = inlined_call_operand.hbm [shape: f32[4,8,32], index: 12, kind: output, shape index: {}]
  %s13 = sld [smem:[#allocation0]]
  $region89: #{tpu_custom_call.1} parent=0
    _
  %s15 = ssub.s32 1, %s13
  %s16 = scalar_select 0, %s15, %s13
  $region1: #{tpu_custom_call.1} parent=0
    #allocation2 [shape = 'u8[16384]{0}', space=vmem, size = 0x4000, scoped, tag = 'input window, operand 0']
    #allocation3 [shape = 's32[2]{0}', space=sflag, size = 0x8, scoped, tag = 'scoped memory for tpu_custom_call.1']
    #allocation4 [shape = 's32[2]{0}', space=sflag, size = 0x8, scoped, tag = 'scoped memory for tpu_custom_call.1']
    #allocation5 [shape = 'u8[16384]{0}', space=vmem, size = 0x4000, scoped, tag = 'output window, operand 0']
    %17 = vsyncpa [#allocation3], 0
    %s18 = scalar_lea.sflag [#allocation3], 1
    %19 = vsyncpa %s18, 0
    %20 = vsyncpa [#allocation4], 0
    %s21 = scalar_lea.sflag [#allocation4], 1
    %22 = vsyncpa %s21, 0
    loop: start=0, step=1, limit=6
    $region2: #{tpu_custom_call.1} parent=1 // loop_pre_header
      _
    $region3: #{tpu_custom_call.1} parent=1 // loop_header
      %s24 = sphi 0, %s28
      %p25 = scmp.ge.s32.totalorder %s24, 6
      %s31 = sphi 0, %s43
      %s32 = sphi 0, %s39
      %s33 = sphi 0, %s31
      %s34 = sphi 0, %s32
      %s35 = sphi 0, %s33
      %s36 = sphi 0, %s34
      %s46 = sphi 0, %s48
      %s49 = sphi 0, %s46
      %s50 = sphi 0, %s49
      %s66 = sphi 0, %s50
      %s72 = sphi 0, %s74
      %s75 = sphi 0, %s72
      %s76 = sphi 0, %s75
      %s92 = sphi 0, %s76
      %s98 = sphi 0, %s100
      %s101 = sphi 0, %s98
      %s102 = sphi 0, %s101
      %s118 = sphi 0, %s102
      %s124 = sphi 0, %s126
      %s127 = sphi 0, %s124
      %s128 = sphi 0, %s127
      %s144 = sphi 0, %s128
      %s150 = sphi 0, %s152
      %s153 = sphi 0, %s150
      %s154 = sphi 0, %s153
      %s170 = sphi 0, %s154
      %s176 = sphi 0, %s178
      %s179 = sphi 0, %s176
      %s180 = sphi 0, %s179
      %s196 = sphi 0, %s180
      %s202 = sphi 0, %s204
      %s205 = sphi 0, %s202
      %s206 = sphi 0, %s205
      %s222 = sphi 0, %s206
      %s228 = sphi 0, %s230
      %s231 = sphi 0, %s228
      %s232 = sphi 0, %s231
      %s248 = sphi 0, %s232
      %s254 = sphi 0, %s256
      %s257 = sphi 0, %s254
      %s258 = sphi 0, %s257
      %s274 = sphi 0, %s258
      %s280 = sphi 0, %s282
      %s283 = sphi 0, %s280
      %s284 = sphi 0, %s283
      %s300 = sphi 0, %s284
      %s306 = sphi 0, %s308
      %s309 = sphi 0, %s306
      %s310 = sphi 0, %s309
      %s326 = sphi 0, %s310
      %s332 = sphi 0, %s334
      %s335 = sphi 0, %s332
      %s336 = sphi 0, %s335
      %s352 = sphi 0, %s336
      %s358 = sphi 0, %s360
      %s361 = sphi 0, %s358
      %s362 = sphi 0, %s361
      %s378 = sphi 0, %s362
    $region4: #{tpu_custom_call.1} parent=1 // loop_header_branch
      %27 = sbr.rel (%p25) target = $region8
    $region5: #{tpu_custom_call.1} parent=1 // loop_body
      %s29 = ssub.s32 %s24, 1
      %s30 = ssub.s32 %s24, 2
      %s37 = sadd.s32 1, %s32
      %p38 = scmp.ge.s32.totalorder %s37, 2
      %s39 = scalar_select %p38, 0, %s37
      %s40 = sadd.s32 1, %s31
      %s41 = scalar_select %p38, %s40, %s31
      %p42 = scmp.ge.s32.totalorder %s41, 2
      %s43 = scalar_select %p42, 0, %s41
      %s44 = ssub.s32 %s31, %s43
      %p45 = scmp.eq.s32.totalorder %s44, 0
      %s47 = sadd.s32 %s46, 1
      %s48 = scalar_select %p45, %s46, %s47
      %p51 = pneg %p45
      %p52 = scmp.eq.s32.totalorder %s24, 3
      %p53 = por %p51, %p52
      %p54 = scmp.ne.s32.totalorder %s46, %s49
      %p55 = scmp.eq.s32.totalorder %s24, 0
      %p56 = por %p54, %p55
      %p57 = scmp.ne.s32.totalorder %s46, %s49
      %p58 = scmp.eq.s32.totalorder %s29, 3
      %p59 = por %p57, %p58
      %p60 = scmp.ne.s32.totalorder %s49, %s50
      %p61 = scmp.eq.s32.totalorder %s29, 0
      %p62 = por %p60, %p61
      %p63 = scmp.ne.s32.totalorder %s49, %s50
      %p64 = scmp.eq.s32.totalorder %s30, 3
      %p65 = por %p63, %p64
      %p67 = scmp.ne.s32.totalorder %s50, %s66
      %p68 = scmp.eq.s32.totalorder %s30, 0
      %p69 = por %p67, %p68
      %s70 = ssub.s32 %s32, %s39
      %p71 = scmp.eq.s32.totalorder %s70, 0
      %s73 = sadd.s32 %s72, 1
      %s74 = scalar_select %p71, %s72, %s73
      %p77 = pneg %p71
      %p78 = scmp.eq.s32.totalorder %s24, 3
      %p79 = por %p77, %p78
      %p80 = scmp.ne.s32.totalorder %s72, %s75
      %p81 = scmp.eq.s32.totalorder %s24, 0
      %p82 = por %p80, %p81
      %p83 = scmp.ne.s32.totalorder %s72, %s75
      %p84 = scmp.eq.s32.totalorder %s29, 3
      %p85 = por %p83, %p84
      %p86 = scmp.ne.s32.totalorder %s75, %s76
      %p87 = scmp.eq.s32.totalorder %s29, 0
      %p88 = por %p86, %p87
      %p89 = scmp.ne.s32.totalorder %s75, %s76
      %p90 = scmp.eq.s32.totalorder %s30, 3
      %p91 = por %p89, %p90
      %p93 = scmp.ne.s32.totalorder %s76, %s92
      %p94 = scmp.eq.s32.totalorder %s30, 0
      %p95 = por %p93, %p94
      %s96 = ssub.s32 %s32, %s39
      %p97 = scmp.eq.s32.totalorder %s96, 0
      %s99 = sadd.s32 %s98, 1
      %s100 = scalar_select %p97, %s98, %s99
      %p103 = pneg %p97
      %p104 = scmp.eq.s32.totalorder %s24, 3
      %p105 = por %p103, %p104
      %p106 = scmp.ne.s32.totalorder %s98, %s101
      %p107 = scmp.eq.s32.totalorder %s24, 0
      %p108 = por %p106, %p107
      %p109 = scmp.ne.s32.totalorder %s98, %s101
      %p110 = scmp.eq.s32.totalorder %s29, 3
      %p111 = por %p109, %p110
      %p112 = scmp.ne.s32.totalorder %s101, %s102
      %p113 = scmp.eq.s32.totalorder %s29, 0
      %p114 = por %p112, %p113
      %p115 = scmp.ne.s32.totalorder %s101, %s102
      %p116 = scmp.eq.s32.totalorder %s30, 3
      %p117 = por %p115, %p116
      %p119 = scmp.ne.s32.totalorder %s102, %s118
      %p120 = scmp.eq.s32.totalorder %s30, 0
      %p121 = por %p119, %p120
      %s122 = ssub.s32 %s32, %s39
      %p123 = scmp.eq.s32.totalorder %s122, 0
      %s125 = sadd.s32 %s124, 1
      %s126 = scalar_select %p123, %s124, %s125
      %p129 = pneg %p123
      %p130 = scmp.eq.s32.totalorder %s24, 3
      %p131 = por %p129, %p130
      %p132 = scmp.ne.s32.totalorder %s124, %s127
      %p133 = scmp.eq.s32.totalorder %s24, 0
      %p134 = por %p132, %p133
      %p135 = scmp.ne.s32.totalorder %s124, %s127
      %p136 = scmp.eq.s32.totalorder %s29, 3
      %p137 = por %p135, %p136
      %p138 = scmp.ne.s32.totalorder %s127, %s128
      %p139 = scmp.eq.s32.totalorder %s29, 0
      %p140 = por %p138, %p139
      %p141 = scmp.ne.s32.totalorder %s127, %s128
      %p142 = scmp.eq.s32.totalorder %s30, 3
      %p143 = por %p141, %p142
      %p145 = scmp.ne.s32.totalorder %s128, %s144
      %p146 = scmp.eq.s32.totalorder %s30, 0
      %p147 = por %p145, %p146
      %s148 = ssub.s32 %s32, %s39
      %p149 = scmp.eq.s32.totalorder %s148, 0
      %s151 = sadd.s32 %s150, 1
      %s152 = scalar_select %p149, %s150, %s151
      %p155 = pneg %p149
      %p156 = scmp.eq.s32.totalorder %s24, 3
      %p157 = por %p155, %p156
      %p158 = scmp.ne.s32.totalorder %s150, %s153
      %p159 = scmp.eq.s32.totalorder %s24, 0
      %p160 = por %p158, %p159
      %p161 = scmp.ne.s32.totalorder %s150, %s153
      %p162 = scmp.eq.s32.totalorder %s29, 3
      %p163 = por %p161, %p162
      %p164 = scmp.ne.s32.totalorder %s153, %s154
      %p165 = scmp.eq.s32.totalorder %s29, 0
      %p166 = por %p164, %p165
      %p167 = scmp.ne.s32.totalorder %s153, %s154
      %p168 = scmp.eq.s32.totalorder %s30, 3
      %p169 = por %p167, %p168
      %p171 = scmp.ne.s32.totalorder %s154, %s170
      %p172 = scmp.eq.s32.totalorder %s30, 0
      %p173 = por %p171, %p172
      %s174 = ssub.s32 %s32, %s39
      %p175 = scmp.eq.s32.totalorder %s174, 0
      %s177 = sadd.s32 %s176, 1
      %s178 = scalar_select %p175, %s176, %s177
      %p181 = pneg %p175
      %p182 = scmp.eq.s32.totalorder %s24, 3
      %p183 = por %p181, %p182
      %p184 = scmp.ne.s32.totalorder %s176, %s179
      %p185 = scmp.eq.s32.totalorder %s24, 0
      %p186 = por %p184, %p185
      %p187 = scmp.ne.s32.totalorder %s176, %s179
      %p188 = scmp.eq.s32.totalorder %s29, 3
      %p189 = por %p187, %p188
      %p190 = scmp.ne.s32.totalorder %s179, %s180
      %p191 = scmp.eq.s32.totalorder %s29, 0
      %p192 = por %p190, %p191
      %p193 = scmp.ne.s32.totalorder %s179, %s180
      %p194 = scmp.eq.s32.totalorder %s30, 3
      %p195 = por %p193, %p194
      %p197 = scmp.ne.s32.totalorder %s180, %s196
      %p198 = scmp.eq.s32.totalorder %s30, 0
      %p199 = por %p197, %p198
      %s200 = ssub.s32 %s32, %s39
      %p201 = scmp.eq.s32.totalorder %s200, 0
      %s203 = sadd.s32 %s202, 1
      %s204 = scalar_select %p201, %s202, %s203
      %p207 = pneg %p201
      %p208 = scmp.eq.s32.totalorder %s24, 3
      %p209 = por %p207, %p208
      %p210 = scmp.ne.s32.totalorder %s202, %s205
      %p211 = scmp.eq.s32.totalorder %s24, 0
      %p212 = por %p210, %p211
      %p213 = scmp.ne.s32.totalorder %s202, %s205
      %p214 = scmp.eq.s32.totalorder %s29, 3
      %p215 = por %p213, %p214
      %p216 = scmp.ne.s32.totalorder %s205, %s206
      %p217 = scmp.eq.s32.totalorder %s29, 0
      %p218 = por %p216, %p217
      %p219 = scmp.ne.s32.totalorder %s205, %s206
      %p220 = scmp.eq.s32.totalorder %s30, 3
      %p221 = por %p219, %p220
      %p223 = scmp.ne.s32.totalorder %s206, %s222
      %p224 = scmp.eq.s32.totalorder %s30, 0
      %p225 = por %p223, %p224
      %s226 = ssub.s32 %s32, %s39
      %p227 = scmp.eq.s32.totalorder %s226, 0
      %s229 = sadd.s32 %s228, 1
      %s230 = scalar_select %p227, %s228, %s229
      %p233 = pneg %p227
      %p234 = scmp.eq.s32.totalorder %s24, 3
      %p235 = por %p233, %p234
      %p236 = scmp.ne.s32.totalorder %s228, %s231
      %p237 = scmp.eq.s32.totalorder %s24, 0
      %p238 = por %p236, %p237
      %p239 = scmp.ne.s32.totalorder %s228, %s231
      %p240 = scmp.eq.s32.totalorder %s29, 3
      %p241 = por %p239, %p240
      %p242 = scmp.ne.s32.totalorder %s231, %s232
      %p243 = scmp.eq.s32.totalorder %s29, 0
      %p244 = por %p242, %p243
      %p245 = scmp.ne.s32.totalorder %s231, %s232
      %p246 = scmp.eq.s32.totalorder %s30, 3
      %p247 = por %p245, %p246
      %p249 = scmp.ne.s32.totalorder %s232, %s248
      %p250 = scmp.eq.s32.totalorder %s30, 0
      %p251 = por %p249, %p250
      %s252 = ssub.s32 %s32, %s39
      %p253 = scmp.eq.s32.totalorder %s252, 0
      %s255 = sadd.s32 %s254, 1
      %s256 = scalar_select %p253, %s254, %s255
      %p259 = pneg %p253
      %p260 = scmp.eq.s32.totalorder %s24, 3
      %p261 = por %p259, %p260
      %p262 = scmp.ne.s32.totalorder %s254, %s257
      %p263 = scmp.eq.s32.totalorder %s24, 0
      %p264 = por %p262, %p263
      %p265 = scmp.ne.s32.totalorder %s254, %s257
      %p266 = scmp.eq.s32.totalorder %s29, 3
      %p267 = por %p265, %p266
      %p268 = scmp.ne.s32.totalorder %s257, %s258
      %p269 = scmp.eq.s32.totalorder %s29, 0
      %p270 = por %p268, %p269
      %p271 = scmp.ne.s32.totalorder %s257, %s258
      %p272 = scmp.eq.s32.totalorder %s30, 3
      %p273 = por %p271, %p272
      %p275 = scmp.ne.s32.totalorder %s258, %s274
      %p276 = scmp.eq.s32.totalorder %s30, 0
      %p277 = por %p275, %p276
      %s278 = ssub.s32 %s32, %s39
      %p279 = scmp.eq.s32.totalorder %s278, 0
      %s281 = sadd.s32 %s280, 1
      %s282 = scalar_select %p279, %s280, %s281
      %p285 = pneg %p279
      %p286 = scmp.eq.s32.totalorder %s24, 3
      %p287 = por %p285, %p286
      %p288 = scmp.ne.s32.totalorder %s280, %s283
      %p289 = scmp.eq.s32.totalorder %s24, 0
      %p290 = por %p288, %p289
      %p291 = scmp.ne.s32.totalorder %s280, %s283
      %p292 = scmp.eq.s32.totalorder %s29, 3
      %p293 = por %p291, %p292
      %p294 = scmp.ne.s32.totalorder %s283, %s284
      %p295 = scmp.eq.s32.totalorder %s29, 0
      %p296 = por %p294, %p295
      %p297 = scmp.ne.s32.totalorder %s283, %s284
      %p298 = scmp.eq.s32.totalorder %s30, 3
      %p299 = por %p297, %p298
      %p301 = scmp.ne.s32.totalorder %s284, %s300
      %p302 = scmp.eq.s32.totalorder %s30, 0
      %p303 = por %p301, %p302
      %s304 = ssub.s32 %s32, %s39
      %p305 = scmp.eq.s32.totalorder %s304, 0
      %s307 = sadd.s32 %s306, 1
      %s308 = scalar_select %p305, %s306, %s307
      %p311 = pneg %p305
      %p312 = scmp.eq.s32.totalorder %s24, 3
      %p313 = por %p311, %p312
      %p314 = scmp.ne.s32.totalorder %s306, %s309
      %p315 = scmp.eq.s32.totalorder %s24, 0
      %p316 = por %p314, %p315
      %p317 = scmp.ne.s32.totalorder %s306, %s309
      %p318 = scmp.eq.s32.totalorder %s29, 3
      %p319 = por %p317, %p318
      %p320 = scmp.ne.s32.totalorder %s309, %s310
      %p321 = scmp.eq.s32.totalorder %s29, 0
      %p322 = por %p320, %p321
      %p323 = scmp.ne.s32.totalorder %s309, %s310
      %p324 = scmp.eq.s32.totalorder %s30, 3
      %p325 = por %p323, %p324
      %p327 = scmp.ne.s32.totalorder %s310, %s326
      %p328 = scmp.eq.s32.totalorder %s30, 0
      %p329 = por %p327, %p328
      %s330 = ssub.s32 %s32, %s39
      %p331 = scmp.eq.s32.totalorder %s330, 0
      %s333 = sadd.s32 %s332, 1
      %s334 = scalar_select %p331, %s332, %s333
      %p337 = pneg %p331
      %p338 = scmp.eq.s32.totalorder %s24, 3
      %p339 = por %p337, %p338
      %p340 = scmp.ne.s32.totalorder %s332, %s335
      %p341 = scmp.eq.s32.totalorder %s24, 0
      %p342 = por %p340, %p341
      %p343 = scmp.ne.s32.totalorder %s332, %s335
      %p344 = scmp.eq.s32.totalorder %s29, 3
      %p345 = por %p343, %p344
      %p346 = scmp.ne.s32.totalorder %s335, %s336
      %p347 = scmp.eq.s32.totalorder %s29, 0
      %p348 = por %p346, %p347
      %p349 = scmp.ne.s32.totalorder %s335, %s336
      %p350 = scmp.eq.s32.totalorder %s30, 3
      %p351 = por %p349, %p350
      %p353 = scmp.ne.s32.totalorder %s336, %s352
      %p354 = scmp.eq.s32.totalorder %s30, 0
      %p355 = por %p353, %p354
      %s356 = ssub.s32 %s31, %s43
      %p357 = scmp.eq.s32.totalorder %s356, 0
      %s359 = sadd.s32 %s358, 1
      %s360 = scalar_select %p357, %s358, %s359
      %p363 = pneg %p357
      %p364 = scmp.eq.s32.totalorder %s24, 3
      %p365 = por %p363, %p364
      %p366 = scmp.ne.s32.totalorder %s358, %s361
      %p367 = scmp.eq.s32.totalorder %s24, 0
      %p368 = por %p366, %p367
      %p369 = scmp.ne.s32.totalorder %s358, %s361
      %p370 = scmp.eq.s32.totalorder %s29, 3
      %p371 = por %p369, %p370
      %p372 = scmp.ne.s32.totalorder %s361, %s362
      %p373 = scmp.eq.s32.totalorder %s29, 0
      %p374 = por %p372, %p373
      %p375 = scmp.ne.s32.totalorder %s361, %s362
      %p376 = scmp.eq.s32.totalorder %s30, 3
      %p377 = por %p375, %p376
      %p379 = scmp.ne.s32.totalorder %s362, %s378
      %p380 = scmp.eq.s32.totalorder %s30, 0
      %p381 = por %p379, %p380
      %p382 = scmp.le.s32.totalorder 1, %s24
      %p383 = scmp.lt.s32.totalorder %s24, 5
      %p384 = pnand %p382, %p383
      %p385 = pneg %p384
      // Predicated region
      $region9: #{tpu_custom_call.1} parent=5 // pred_check
        _
      $region10: #{tpu_custom_call.1} parent=5 // pred_check_branch
        %387 = sbr.rel (%p384) target = $region12
      $region11: #{tpu_custom_call.1} parent=5 // pred_region
        %s388 = ssub.s32 %s24, 1
      $region12: #{tpu_custom_call.1} parent=5 // pred_fallthru
        _
      %p389 = scmp.lt.s32.totalorder %s24, 4
      // Predicated region
      $region13: #{tpu_custom_call.1} parent=5 // pred_check
        %p390 = pneg %p389
      $region14: #{tpu_custom_call.1} parent=5 // pred_check_branch
        %392 = sbr.rel (%p390) target = $region16
      $region15: #{tpu_custom_call.1} parent=5 // pred_region
        // Predicated region
        $region17: #{tpu_custom_call.1} parent=15 // pred_check
          %p393 = pneg %p56
        $region18: #{tpu_custom_call.1} parent=15 // pred_check_branch
          %395 = sbr.rel (%p393) target = $region20
        $region19: #{tpu_custom_call.1} parent=15 // pred_region
          %s396 = sand.u32 %s46, 1
          %s397 = scalar_lea.sflag [#allocation3], %s396
          %s398 = sand.u32 %s46, 1
          %s399 = smul.addr %s398, 16
          %s400 = scalar_lea.vmem [#allocation2], %s399
          %s401 = smul.u32 2, %s31
          %s403 = ssub.s32 256, 256
          %404 = vsyncadd %s397, %s403
          %s405 = smul.addr %s401, 128
          %s406 = scalar_lea.hbm %s0, %s405
          %s407 = sshll.u32 %s400, 4
          %s408 = int_to_ptr.vmem [resolvable:$true] %s407
          %413 = dma.hbm_to_vmem [thread:$0]  %s406, 256, %s408, %s397, 128, 128, 8
        $region20: #{tpu_custom_call.1} parent=15 // pred_fallthru
          _
        // Predicated region
        $region21: #{tpu_custom_call.1} parent=15 // pred_check
          %p414 = pneg %p82
        $region22: #{tpu_custom_call.1} parent=15 // pred_check_branch
          %416 = sbr.rel (%p414) target = $region24
        $region23: #{tpu_custom_call.1} parent=15 // pred_region
          %p417 = scmp.lt.s32.totalorder %s32, 1
          %s418 = scalar_select %p417, %s32, 1
          %s419 = scalar_lea.vmem %s1, %s418
        $region24: #{tpu_custom_call.1} parent=15 // pred_fallthru
          _
        // Predicated region
        $region25: #{tpu_custom_call.1} parent=15 // pred_check
          %p420 = pneg %p108
        $region26: #{tpu_custom_call.1} parent=15 // pred_check_branch
          %422 = sbr.rel (%p420) target = $region28
        $region27: #{tpu_custom_call.1} parent=15 // pred_region
          %p423 = scmp.lt.s32.totalorder %s32, 1
          %s424 = scalar_select %p423, %s32, 1
          %s425 = scalar_lea.vmem %s2, %s424
        $region28: #{tpu_custom_call.1} parent=15 // pred_fallthru
          _
        // Predicated region
        $region29: #{tpu_custom_call.1} parent=15 // pred_check
          %p426 = pneg %p134
        $region30: #{tpu_custom_call.1} parent=15 // pred_check_branch
          %428 = sbr.rel (%p426) target = $region32
        $region31: #{tpu_custom_call.1} parent=15 // pred_region
          %p429 = scmp.lt.s32.totalorder %s32, 1
          %s430 = scalar_select %p429, %s32, 1
          %s431 = smul.addr %s430, 4
          %s432 = smul.addr %s431, 8
          %s433 = scalar_lea.vmem %s3, %s432
        $region32: #{tpu_custom_call.1} parent=15 // pred_fallthru
          _
        // Predicated region
        $region33: #{tpu_custom_call.1} parent=15 // pred_check
          %p434 = pneg %p160
        $region34: #{tpu_custom_call.1} parent=15 // pred_check_branch
          %436 = sbr.rel (%p434) target = $region36
        $region35: #{tpu_custom_call.1} parent=15 // pred_region
          %p437 = scmp.lt.s32.totalorder %s32, 1
          %s438 = scalar_select %p437, %s32, 1
          %s439 = smul.addr %s438, 4
          %s440 = smul.addr %s439, 8
          %s441 = scalar_lea.vmem %s4, %s440
        $region36: #{tpu_custom_call.1} parent=15 // pred_fallthru
          _
        // Predicated region
        $region37: #{tpu_custom_call.1} parent=15 // pred_check
          %p442 = pneg %p186
        $region38: #{tpu_custom_call.1} parent=15 // pred_check_branch
          %444 = sbr.rel (%p442) target = $region40
        $region39: #{tpu_custom_call.1} parent=15 // pred_region
          %p445 = scmp.lt.s32.totalorder %s32, 1
          %s446 = scalar_select %p445, %s32, 1
          %s447 = scalar_lea.vmem %s5, %s446
        $region40: #{tpu_custom_call.1} parent=15 // pred_fallthru
          _
        // Predicated region
        $region41: #{tpu_custom_call.1} parent=15 // pred_check
          %p448 = pneg %p212
        $region42: #{tpu_custom_call.1} parent=15 // pred_check_branch
          %450 = sbr.rel (%p448) target = $region44
        $region43: #{tpu_custom_call.1} parent=15 // pred_region
          %p451 = scmp.lt.s32.totalorder %s32, 1
          %s452 = scalar_select %p451, %s32, 1
          %s453 = scalar_lea.vmem %s6, %s452
        $region44: #{tpu_custom_call.1} parent=15 // pred_fallthru
          _
        // Predicated region
        $region45: #{tpu_custom_call.1} parent=15 // pred_check
          %p454 = pneg %p238
        $region46: #{tpu_custom_call.1} parent=15 // pred_check_branch
          %456 = sbr.rel (%p454) target = $region48
        $region47: #{tpu_custom_call.1} parent=15 // pred_region
          %p457 = scmp.lt.s32.totalorder %s32, 1
          %s458 = scalar_select %p457, %s32, 1
          %s459 = scalar_lea.vmem %s7, %s458
        $region48: #{tpu_custom_call.1} parent=15 // pred_fallthru
          _
        // Predicated region
        $region49: #{tpu_custom_call.1} parent=15 // pred_check
          %p460 = pneg %p264
        $region50: #{tpu_custom_call.1} parent=15 // pred_check_branch
          %462 = sbr.rel (%p460) target = $region52
        $region51: #{tpu_custom_call.1} parent=15 // pred_region
          %p463 = scmp.lt.s32.totalorder %s32, 1
          %s464 = scalar_select %p463, %s32, 1
          %s465 = smul.addr %s464, 4
          %s466 = smul.addr %s465, 8
          %s467 = scalar_lea.vmem %s8, %s466
        $region52: #{tpu_custom_call.1} parent=15 // pred_fallthru
          _
        // Predicated region
        $region53: #{tpu_custom_call.1} parent=15 // pred_check
          %p468 = pneg %p290
        $region54: #{tpu_custom_call.1} parent=15 // pred_check_branch
          %470 = sbr.rel (%p468) target = $region56
        $region55: #{tpu_custom_call.1} parent=15 // pred_region
          %p471 = scmp.lt.s32.totalorder %s32, 1
          %s472 = scalar_select %p471, %s32, 1
          %s473 = scalar_lea.vmem %s9, %s472
        $region56: #{tpu_custom_call.1} parent=15 // pred_fallthru
          _
        // Predicated region
        $region57: #{tpu_custom_call.1} parent=15 // pred_check
          %p474 = pneg %p316
        $region58: #{tpu_custom_call.1} parent=15 // pred_check_branch
          %476 = sbr.rel (%p474) target = $region60
        $region59: #{tpu_custom_call.1} parent=15 // pred_region
          %p477 = scmp.lt.s32.totalorder %s32, 1
          %s478 = scalar_select %p477, %s32, 1
          %s479 = smul.addr %s478, 8
          %s480 = smul.addr %s479, 8
          %s481 = scalar_lea.vmem %s10, %s480
        $region60: #{tpu_custom_call.1} parent=15 // pred_fallthru
          _
        // Predicated region
        $region61: #{tpu_custom_call.1} parent=15 // pred_check
          %p482 = pneg %p342
        $region62: #{tpu_custom_call.1} parent=15 // pred_check_branch
          %484 = sbr.rel (%p482) target = $region64
        $region63: #{tpu_custom_call.1} parent=15 // pred_region
          %p485 = scmp.lt.s32.totalorder %s32, 1
          %s486 = scalar_select %p485, %s32, 1
          %s487 = scalar_lea.vmem %s11, %s486
        $region64: #{tpu_custom_call.1} parent=15 // pred_fallthru
          _
      $region16: #{tpu_custom_call.1} parent=5 // pred_fallthru
        _
      %p488 = scmp.le.s32.totalorder 1, %s24
      %p489 = scmp.lt.s32.totalorder %s24, 5
      %p490 = pnand %p488, %p489
      %p491 = pneg %p490
      // Predicated region
      $region65: #{tpu_custom_call.1} parent=5 // pred_check
        _
      $region66: #{tpu_custom_call.1} parent=5 // pred_check_branch
        %493 = sbr.rel (%p490) target = $region68
      $region67: #{tpu_custom_call.1} parent=5 // pred_region
        %s494 = ssub.s32 %s24, 1
        %s495 = sand.u32 %s49, 1
        %s496 = scalar_lea.sflag [#allocation3], %s495
        %s497 = sand.u32 %s49, 1
        %s498 = smul.addr %s497, 16
        %s499 = scalar_lea.vmem [#allocation2], %s498
        // Predicated region
        $region69: #{tpu_custom_call.1} parent=67 // pred_check
          %p500 = pneg %p62
        $region70: #{tpu_custom_call.1} parent=67 // pred_check_branch
          %502 = sbr.rel (%p500) target = $region72
        $region71: #{tpu_custom_call.1} parent=67 // pred_region
          %503 = dma.done %s496, 256
        $region72: #{tpu_custom_call.1} parent=67 // pred_fallthru
          _
        %s504 = sand.u32 %s49, 1
        %s505 = scalar_lea.sflag [#allocation3], %s504
        %s506 = sand.u32 %s49, 1
        %s507 = smul.addr %s506, 16
        %s508 = scalar_lea.vmem [#allocation2], %s507
        %p509 = pneg %p62
        %p510 = pneg %p59
        %p511 = scmp.lt.s32.totalorder %s34, 1
        %s512 = scalar_select %p511, %s34, 1
        %s513 = scalar_lea.vmem %s1, %s512
        %p514 = pneg %p88
        %p515 = pneg %p85
        %p516 = scmp.lt.s32.totalorder %s34, 1
        %s517 = scalar_select %p516, %s34, 1
        %s518 = scalar_lea.vmem %s2, %s517
        %p519 = pneg %p114
        %p520 = pneg %p111
        %p521 = scmp.lt.s32.totalorder %s34, 1
        %s522 = scalar_select %p521, %s34, 1
        %s523 = smul.addr %s522, 4
        %s524 = smul.addr %s523, 8
        %s525 = scalar_lea.vmem %s3, %s524
        %p526 = pneg %p140
        %p527 = pneg %p137
        %p528 = scmp.lt.s32.totalorder %s34, 1
        %s529 = scalar_select %p528, %s34, 1
        %s530 = smul.addr %s529, 4
        %s531 = smul.addr %s530, 8
        %s532 = scalar_lea.vmem %s4, %s531
        %p533 = pneg %p166
        %p534 = pneg %p163
        %p535 = scmp.lt.s32.totalorder %s34, 1
        %s536 = scalar_select %p535, %s34, 1
        %s537 = scalar_lea.vmem %s5, %s536
        %p538 = pneg %p192
        %p539 = pneg %p189
        %p540 = scmp.lt.s32.totalorder %s34, 1
        %s541 = scalar_select %p540, %s34, 1
        %s542 = scalar_lea.vmem %s6, %s541
        %p543 = pneg %p218
        %p544 = pneg %p215
        %p545 = scmp.lt.s32.totalorder %s34, 1
        %s546 = scalar_select %p545, %s34, 1
        %s547 = scalar_lea.vmem %s7, %s546
        %p548 = pneg %p244
        %p549 = pneg %p241
        %p550 = scmp.lt.s32.totalorder %s34, 1
        %s551 = scalar_select %p550, %s34, 1
        %s552 = smul.addr %s551, 4
        %s553 = smul.addr %s552, 8
        %s554 = scalar_lea.vmem %s8, %s553
        %p555 = pneg %p270
        %p556 = pneg %p267
        %p557 = scmp.lt.s32.totalorder %s34, 1
        %s558 = scalar_select %p557, %s34, 1
        %s559 = scalar_lea.vmem %s9, %s558
        %p560 = pneg %p296
        %p561 = pneg %p293
        %p562 = scmp.lt.s32.totalorder %s34, 1
        %s563 = scalar_select %p562, %s34, 1
        %s564 = smul.addr %s563, 8
        %s565 = smul.addr %s564, 8
        %s566 = scalar_lea.vmem %s10, %s565
        %p567 = pneg %p322
        %p568 = pneg %p319
        %p569 = scmp.lt.s32.totalorder %s34, 1
        %s570 = scalar_select %p569, %s34, 1
        %s571 = scalar_lea.vmem %s11, %s570
        %p572 = pneg %p348
        %p573 = pneg %p345
        %p574 = pneg %p374
        %p575 = pneg %p371
        %s576 = sand.u32 %s361, 1
        %s577 = scalar_lea.sflag [#allocation4], %s576
        %s578 = sand.u32 %s361, 1
        %s579 = smul.addr %s578, 16
        %s580 = scalar_lea.vmem [#allocation5], %s579
        %s581 = smul.u32 2, %s33
        %p582 = scmp.lt.s32.totalorder %s34, 1
        %s583 = scalar_select %p582, %s34, 1
        %s584 = scalar_lea.vmem %s1, %s583
        %p585 = scmp.lt.s32.totalorder %s34, 1
        %s586 = scalar_select %p585, %s34, 1
        %s587 = scalar_lea.vmem %s2, %s586
        %p588 = scmp.lt.s32.totalorder %s34, 1
        %s589 = scalar_select %p588, %s34, 1
        %s590 = smul.addr %s589, 4
        %s591 = smul.addr %s590, 8
        %s592 = scalar_lea.vmem %s3, %s591
        %p593 = scmp.lt.s32.totalorder %s34, 1
        %s594 = scalar_select %p593, %s34, 1
        %s595 = smul.addr %s594, 4
        %s596 = smul.addr %s595, 8
        %s597 = scalar_lea.vmem %s4, %s596
        %p598 = scmp.lt.s32.totalorder %s34, 1
        %s599 = scalar_select %p598, %s34, 1
        %s600 = scalar_lea.vmem %s5, %s599
        %p601 = scmp.lt.s32.totalorder %s34, 1
        %s602 = scalar_select %p601, %s34, 1
        %s603 = scalar_lea.vmem %s6, %s602
        %p604 = scmp.lt.s32.totalorder %s34, 1
        %s605 = scalar_select %p604, %s34, 1
        %s606 = scalar_lea.vmem %s7, %s605
        %p607 = scmp.lt.s32.totalorder %s34, 1
        %s608 = scalar_select %p607, %s34, 1
        %s609 = smul.addr %s608, 4
        %s610 = smul.addr %s609, 8
        %s611 = scalar_lea.vmem %s8, %s610
        %p612 = scmp.lt.s32.totalorder %s34, 1
        %s613 = scalar_select %p612, %s34, 1
        %s614 = scalar_lea.vmem %s9, %s613
        %p615 = scmp.lt.s32.totalorder %s34, 1
        %s616 = scalar_select %p615, %s34, 1
        %s617 = smul.addr %s616, 8
        %s618 = smul.addr %s617, 8
        %s619 = scalar_lea.vmem %s10, %s618
        %p620 = scmp.lt.s32.totalorder %s34, 1
        %s621 = scalar_select %p620, %s34, 1
        %s622 = scalar_lea.vmem %s11, %s621
        %s623 = smul.u32 2, %s33
        %p624 = scmp.eq.s32.totalorder %s34, 0
        // Predicated region
        $region73: #{tpu_custom_call.1} parent=67 // pred_check
          %p625 = pneg %p624
        $region74: #{tpu_custom_call.1} parent=67 // pred_check_branch
          %627 = sbr.rel (%p625) target = $region76
        $region75: #{tpu_custom_call.1} parent=67 // pred_region
          %v628 = vld [vmem:[%s499] sm:$0xff]
          %v629 = vld [vmem:[%s499 + $0x8] sm:$0xff]
          %vm630 = vcmask 261120
          %631 = vst.msk [vmem:[%s580] sm:$0xff] %vm630, %v628
          %632 = vst.msk [vmem:[%s580 + $0x8] sm:$0xff] %vm630, %v629
        $region76: #{tpu_custom_call.1} parent=67 // pred_fallthru
          _
        %v633 = vld [vmem:[%s580] sm:$0xff]
        %v634 = vld [vmem:[%s580 + $0x8] sm:$0xff]
        %v635 = vld [vmem:[%s584] sm:$0x1]
        %v636 = vld [vmem:[%s587] sm:$0x1]
        %vm637 = vcmask 261120
        %v638 = vsel %vm637, %v633, 0.0
        %639 = vadd.xlane.f32.xlu0 %v638
        %v640 = vpop.xlane.xlu0 %639
        %v641 = vsel %vm637, %v634, 0.0
        %642 = vadd.xlane.f32.xlu0 %v641
        %v643 = vpop.xlane.xlu0 %642
        %v644 = vrcp.pop 32.0
        %v645 = vmul.f32 %v640, %v644
        %v646 = vmul.f32 %v643, %v644
        %v647 = vsub.f32 %v633, %v645
        %v648 = vsub.f32 %v634, %v646
        %v649 = vmul.f32 %v647, %v647
        %v650 = vmul.f32 %v648, %v648
        %v651 = vsel %vm637, %v649, 0.0
        %652 = vadd.xlane.f32.xlu0 %v651
        %v653 = vpop.xlane.xlu0 %652
        %v654 = vsel %vm637, %v650, 0.0
        %655 = vadd.xlane.f32.xlu0 %v654
        %v656 = vpop.xlane.xlu0 %655
        %v657 = vmul.f32 %v653, %v644
        %v658 = vmul.f32 %v656, %v644
        %v659 = vadd.f32 %v657, 1e-05
        %v660 = vadd.f32 %v658, 1e-05
        %v661 = vrsqrt.pop %v659
        %v662 = vrsqrt.pop %v660
        %v663 = vmul.f32 %v647, %v661
        %v664 = vmul.f32 %v648, %v662
        %v666 = vlaneseq
        %v667 = vshrl.u32 %v666, 7
        %v668 = vsub.s32 0, %v667
        %v669 = vrot.slane %v635, %v668
        %v671 = vmul.f32 %v663, %v669
        %v672 = vmul.f32 %v664, %v669
        %v674 = vlaneseq
        %v675 = vshrl.u32 %v674, 7
        %v676 = vsub.s32 0, %v675
        %v677 = vrot.slane %v636, %v676
        %v679 = vadd.f32 %v671, %v677
        %v680 = vadd.f32 %v672, %v677
        %v681 = vld [vmem:[%s592] sm:$0xff]
        %v682 = vld [vmem:[%s592 + $0x8] sm:$0xff]
        %v683 = vld [vmem:[%s592 + $0x10] sm:$0xff]
        %v684 = vld [vmem:[%s592 + $0x18] sm:$0xff]
        %v686 = vsel %vm637, %v679, 0
        %v689 = vsel %vm637, %v680, 0
        %691 = vmatprep.subr.mxu0 0.0
        %692 = vmatpush1.msra.mxu0 %v681
        %693 = vmatprep.subr.mxu0 0.0
        %694 = vmatpush1.msra.mxu0 %v682
        %695 = vmatprep.subr.mxu0 0.0
        %696 = vmatpush1.msra.mxu0 %v683
        %697 = vmatprep.subr.mxu0 0.0
        %698 = vmatpush1.msra.mxu0 %v684
        %699 = vmatprep.subr.mxu0 0.0
        %700 = vmatpush1.msra.mxu0 0.0
        %701 = vmatprep.subr.mxu0 0.0
        %702 = vmatpush1.msra.mxu0 0.0
        %703 = vmatprep.subr.mxu0 0.0
        %704 = vmatpush1.msra.mxu0 0.0
        %705 = vmatprep.subr.mxu0 0.0
        %706 = vmatpush1.msra.mxu0 0.0
        %707 = vmatprep.subr.mxu0 0.0
        %708 = vmatpush1.msra.mxu0 0.0
        %709 = vmatprep.subr.mxu0 0.0
        %710 = vmatpush1.msra.mxu0 0.0
        %711 = vmatprep.subr.mxu0 0.0
        %712 = vmatpush1.msra.mxu0 0.0
        %713 = vmatprep.subr.mxu0 0.0
        %714 = vmatpush1.msra.mxu0 0.0
        %715 = vmatprep.subr.mxu0 0.0
        %716 = vmatpush1.msra.mxu0 0.0
        %717 = vmatprep.subr.mxu0 0.0
        %718 = vmatpush1.msra.mxu0 0.0
        %719 = vmatprep.subr.mxu0 0.0
        %720 = vmatpush1.msra.mxu0 0.0
        %721 = vmatprep.subr.mxu0 0.0
        %722 = vmatpush1.msra.mxu0 0.0
        %723 = vmatprep.subr.mxu0 0.0
        %724 = vmatpush1.msra.mxu0 0.0
        %725 = vmatprep.subr.mxu0 0.0
        %726 = vmatpush1.msra.mxu0 0.0
        %727 = vmatprep.subr.mxu0 0.0
        %728 = vmatpush1.msra.mxu0 0.0
        %729 = vmatprep.subr.mxu0 0.0
        %730 = vmatpush1.msra.mxu0 0.0
        %731 = vmatprep.subr.mxu0 0.0
        %732 = vmatpush1.msra.mxu0 0.0
        %733 = vmatprep.subr.mxu0 0.0
        %734 = vmatpush1.msra.mxu0 0.0
        %735 = vmatprep.subr.mxu0 0.0
        %736 = vmatpush1.msra.mxu0 0.0
        %737 = vmatprep.subr.mxu0 0.0
        %738 = vmatpush1.msra.mxu0 0.0
        %739 = vmatprep.subr.mxu0 0.0
        %740 = vmatpush1.msra.mxu0 0.0
        %741 = vmatprep.subr.mxu0 0.0
        %742 = vmatpush1.msra.mxu0 0.0
        %743 = vmatprep.subr.mxu0 0.0
        %744 = vmatpush1.msra.mxu0 0.0
        %745 = vmatprep.subr.mxu0 0.0
        %746 = vmatpush1.msra.mxu0 0.0
        %747 = vmatprep.subr.mxu0 0.0
        %748 = vmatpush1.msra.mxu0 0.0
        %749 = vmatprep.subr.mxu0 0.0
        %750 = vmatpush1.msra.mxu0 0.0
        %751 = vmatprep.subr.mxu0 0.0
        %752 = vmatpush1.msra.mxu0 0.0
        %753 = vmatprep.subr.mxu0 0.0
        %754 = vmatpush1.msra.mxu0 0.0
        %755 = vmatprep.mubr.f32.mxu0 0.0
        %756 = vmatmul.mubr.f32.gmra.mrb[0].mxu0 %v686
        %v757 = vpop.f32.mrb[0].mxu0
        %v758 = vadd.f32 0.0, %v757
        %v759 = vpop.f32.mrb[0].mxu0
        %760 = vmatprep.mubr.f32.mxu0 0.0
        %761 = vmatmul.mubr.f32.gmra.mrb[0].mxu0 %v689
        %v762 = vpop.f32.mrb[0].mxu0
        %v763 = vadd.f32 0.0, %v762
        %v764 = vpop.f32.mrb[0].mxu0
        %765 = vdwg.mxu0
        %767 = vrot.lane.b32.xlu0 %v758, 96
        %v768 = vpop.permute.xlu0 %767
        %vm769 = vcmask 64512
        %v770 = vsel %vm769, %v758, 0
        %v772 = vsel %vm769, %v768, 0
        %774 = vmatprep.subr.mxu0 0.0
        %775 = vmatpush1.xpose.msra.mxu0 %v772
        %776 = vmatprep.subr.mxu0 0.0
        %777 = vmatpush1.xpose.msra.mxu0 0.0
        %778 = vmatprep.subr.mxu0 0.0
        %779 = vmatpush1.xpose.msra.mxu0 0.0
        %780 = vmatprep.subr.mxu0 0.0
        %781 = vmatpush1.xpose.msra.mxu0 0.0
        %782 = vmatprep.subr.mxu0 0.0
        %783 = vmatpush1.xpose.msra.mxu0 0.0
        %784 = vmatprep.subr.mxu0 0.0
        %785 = vmatpush1.xpose.msra.mxu0 0.0
        %786 = vmatprep.subr.mxu0 0.0
        %787 = vmatpush1.xpose.msra.mxu0 0.0
        %788 = vmatprep.subr.mxu0 0.0
        %789 = vmatpush1.xpose.msra.mxu0 0.0
        %790 = vmatprep.subr.mxu0 0.0
        %791 = vmatpush1.xpose.msra.mxu0 0.0
        %792 = vmatprep.subr.mxu0 0.0
        %793 = vmatpush1.xpose.msra.mxu0 0.0
        %794 = vmatprep.subr.mxu0 0.0
        %795 = vmatpush1.xpose.msra.mxu0 0.0
        %796 = vmatprep.subr.mxu0 0.0
        %797 = vmatpush1.xpose.msra.mxu0 0.0
        %798 = vmatprep.subr.mxu0 0.0
        %799 = vmatpush1.xpose.msra.mxu0 0.0
        %800 = vmatprep.subr.mxu0 0.0
        %801 = vmatpush1.xpose.msra.mxu0 0.0
        %802 = vmatprep.subr.mxu0 0.0
        %803 = vmatpush1.xpose.msra.mxu0 0.0
        %804 = vmatprep.subr.mxu0 0.0
        %805 = vmatpush1.xpose.msra.mxu0 0.0
        %806 = vmatprep.subr.mxu0 0.0
        %807 = vmatpush1.xpose.msra.mxu0 0.0
        %808 = vmatprep.subr.mxu0 0.0
        %809 = vmatpush1.xpose.msra.mxu0 0.0
        %810 = vmatprep.subr.mxu0 0.0
        %811 = vmatpush1.xpose.msra.mxu0 0.0
        %812 = vmatprep.subr.mxu0 0.0
        %813 = vmatpush1.xpose.msra.mxu0 0.0
        %814 = vmatprep.subr.mxu0 0.0
        %815 = vmatpush1.xpose.msra.mxu0 0.0
        %816 = vmatprep.subr.mxu0 0.0
        %817 = vmatpush1.xpose.msra.mxu0 0.0
        %818 = vmatprep.subr.mxu0 0.0
        %819 = vmatpush1.xpose.msra.mxu0 0.0
        %820 = vmatprep.subr.mxu0 0.0
        %821 = vmatpush1.xpose.msra.mxu0 0.0
        %822 = vmatprep.subr.mxu0 0.0
        %823 = vmatpush1.xpose.msra.mxu0 0.0
        %824 = vmatprep.subr.mxu0 0.0
        %825 = vmatpush1.xpose.msra.mxu0 0.0
        %826 = vmatprep.subr.mxu0 0.0
        %827 = vmatpush1.xpose.msra.mxu0 0.0
        %828 = vmatprep.subr.mxu0 0.0
        %829 = vmatpush1.xpose.msra.mxu0 0.0
        %830 = vmatprep.subr.mxu0 0.0
        %831 = vmatpush1.xpose.msra.mxu0 0.0
        %832 = vmatprep.subr.mxu0 0.0
        %833 = vmatpush1.xpose.msra.mxu0 0.0
        %834 = vmatprep.subr.mxu0 0.0
        %835 = vmatpush1.xpose.msra.mxu0 0.0
        %836 = vmatprep.subr.mxu0 0.0
        %837 = vmatpush1.xpose.msra.mxu0 0.0
        %838 = vmatprep.mubr.f32.mxu0 0.0
        %839 = vmatmul.mubr.f32.gmra.mrb[0].mxu0 %v770
        %v840 = vpop.f32.mrb[0].mxu0
        %v841 = vadd.f32 0.0, %v840
        %v842 = vpop.f32.mrb[0].mxu0
        %843 = vdwg.mxu0
        %845 = vrot.lane.b32.xlu0 %v763, 96
        %v846 = vpop.permute.xlu0 %845
        %v847 = vsel %vm769, %v763, 0
        %v849 = vsel %vm769, %v846, 0
        %851 = vmatprep.subr.mxu0 0.0
        %852 = vmatpush1.xpose.msra.mxu0 %v849
        %853 = vmatprep.subr.mxu0 0.0
        %854 = vmatpush1.xpose.msra.mxu0 0.0
        %855 = vmatprep.subr.mxu0 0.0
        %856 = vmatpush1.xpose.msra.mxu0 0.0
        %857 = vmatprep.subr.mxu0 0.0
        %858 = vmatpush1.xpose.msra.mxu0 0.0
        %859 = vmatprep.subr.mxu0 0.0
        %860 = vmatpush1.xpose.msra.mxu0 0.0
        %861 = vmatprep.subr.mxu0 0.0
        %862 = vmatpush1.xpose.msra.mxu0 0.0
        %863 = vmatprep.subr.mxu0 0.0
        %864 = vmatpush1.xpose.msra.mxu0 0.0
        %865 = vmatprep.subr.mxu0 0.0
        %866 = vmatpush1.xpose.msra.mxu0 0.0
        %867 = vmatprep.subr.mxu0 0.0
        %868 = vmatpush1.xpose.msra.mxu0 0.0
        %869 = vmatprep.subr.mxu0 0.0
        %870 = vmatpush1.xpose.msra.mxu0 0.0
        %871 = vmatprep.subr.mxu0 0.0
        %872 = vmatpush1.xpose.msra.mxu0 0.0
        %873 = vmatprep.subr.mxu0 0.0
        %874 = vmatpush1.xpose.msra.mxu0 0.0
        %875 = vmatprep.subr.mxu0 0.0
        %876 = vmatpush1.xpose.msra.mxu0 0.0
        %877 = vmatprep.subr.mxu0 0.0
        %878 = vmatpush1.xpose.msra.mxu0 0.0
        %879 = vmatprep.subr.mxu0 0.0
        %880 = vmatpush1.xpose.msra.mxu0 0.0
        %881 = vmatprep.subr.mxu0 0.0
        %882 = vmatpush1.xpose.msra.mxu0 0.0
        %883 = vmatprep.subr.mxu0 0.0
        %884 = vmatpush1.xpose.msra.mxu0 0.0
        %885 = vmatprep.subr.mxu0 0.0
        %886 = vmatpush1.xpose.msra.mxu0 0.0
        %887 = vmatprep.subr.mxu0 0.0
        %888 = vmatpush1.xpose.msra.mxu0 0.0
        %889 = vmatprep.subr.mxu0 0.0
        %890 = vmatpush1.xpose.msra.mxu0 0.0
        %891 = vmatprep.subr.mxu0 0.0
        %892 = vmatpush1.xpose.msra.mxu0 0.0
        %893 = vmatprep.subr.mxu0 0.0
        %894 = vmatpush1.xpose.msra.mxu0 0.0
        %895 = vmatprep.subr.mxu0 0.0
        %896 = vmatpush1.xpose.msra.mxu0 0.0
        %897 = vmatprep.subr.mxu0 0.0
        %898 = vmatpush1.xpose.msra.mxu0 0.0
        %899 = vmatprep.subr.mxu0 0.0
        %900 = vmatpush1.xpose.msra.mxu0 0.0
        %901 = vmatprep.subr.mxu0 0.0
        %902 = vmatpush1.xpose.msra.mxu0 0.0
        %903 = vmatprep.subr.mxu0 0.0
        %904 = vmatpush1.xpose.msra.mxu0 0.0
        %905 = vmatprep.subr.mxu0 0.0
        %906 = vmatpush1.xpose.msra.mxu0 0.0
        %907 = vmatprep.subr.mxu0 0.0
        %908 = vmatpush1.xpose.msra.mxu0 0.0
        %909 = vmatprep.subr.mxu0 0.0
        %910 = vmatpush1.xpose.msra.mxu0 0.0
        %911 = vmatprep.subr.mxu0 0.0
        %912 = vmatpush1.xpose.msra.mxu0 0.0
        %913 = vmatprep.subr.mxu0 0.0
        %914 = vmatpush1.xpose.msra.mxu0 0.0
        %915 = vmatprep.mubr.f32.mxu0 0.0
        %916 = vmatmul.mubr.f32.gmra.mrb[0].mxu0 %v847
        %v917 = vpop.f32.mrb[0].mxu0
        %v918 = vadd.f32 0.0, %v917
        %v919 = vpop.f32.mrb[0].mxu0
        %920 = vdwg.mxu0
        %v921 = vmul.f32 %v841, 0.35355338
        %v922 = vmul.f32 %v918, 0.35355338
        %v923 = vsel %vm769, %v921, -inf
        %924 = vmax.xlane.f32.xlu0 %v923
        %v925 = vpop.xlane.xlu0 %924
        %v926 = vsel %vm769, %v922, -inf
        %927 = vmax.xlane.f32.xlu0 %v926
        %v928 = vpop.xlane.xlu0 %927
        %v929 = vsub.f32 %v921, %v925
        %v930 = vsub.f32 %v922, %v928
        %v931 = vmul.f32 %v929, 1.442695
        %v932 = vpow.pop %v931
        %v933 = vmul.f32 %v930, 1.442695
        %v934 = vpow.pop %v933
        %v935 = vsel %vm769, %v932, 0.0
        %936 = vadd.xlane.f32.xlu0 %v935
        %v937 = vpop.xlane.xlu0 %936
        %v938 = vsel %vm769, %v934, 0.0
        %939 = vadd.xlane.f32.xlu0 %v938
        %v940 = vpop.xlane.xlu0 %939
        %v941 = vrcp.pop %v937
        %v942 = vrcp.pop %v940
        %v943 = vmul.f32 %v932, %v941
        %v944 = vmul.f32 %v934, %v942
        %945 = vrot.lane.b32.xlu0 %v758, 64
        %v946 = vpop.permute.xlu0 %945
        %v949 = vsel %vm769, %v943, 0
        %951 = vmatprep.subr.mxu0 0.0
        %952 = vmatpush1.msra.mxu0 %v946
        %953 = vmatprep.subr.mxu0 0.0
        %954 = vmatpush1.msra.mxu0 0.0
        %955 = vmatprep.subr.mxu0 0.0
        %956 = vmatpush1.msra.mxu0 0.0
        %957 = vmatprep.subr.mxu0 0.0
        %958 = vmatpush1.msra.mxu0 0.0
        %959 = vmatprep.subr.mxu0 0.0
        %960 = vmatpush1.msra.mxu0 0.0
        %961 = vmatprep.subr.mxu0 0.0
        %962 = vmatpush1.msra.mxu0 0.0
        %963 = vmatprep.subr.mxu0 0.0
        %964 = vmatpush1.msra.mxu0 0.0
        %965 = vmatprep.subr.mxu0 0.0
        %966 = vmatpush1.msra.mxu0 0.0
        %967 = vmatprep.subr.mxu0 0.0
        %968 = vmatpush1.msra.mxu0 0.0
        %969 = vmatprep.subr.mxu0 0.0
        %970 = vmatpush1.msra.mxu0 0.0
        %971 = vmatprep.subr.mxu0 0.0
        %972 = vmatpush1.msra.mxu0 0.0
        %973 = vmatprep.subr.mxu0 0.0
        %974 = vmatpush1.msra.mxu0 0.0
        %975 = vmatprep.subr.mxu0 0.0
        %976 = vmatpush1.msra.mxu0 0.0
        %977 = vmatprep.subr.mxu0 0.0
        %978 = vmatpush1.msra.mxu0 0.0
        %979 = vmatprep.subr.mxu0 0.0
        %980 = vmatpush1.msra.mxu0 0.0
        %981 = vmatprep.subr.mxu0 0.0
        %982 = vmatpush1.msra.mxu0 0.0
        %983 = vmatprep.subr.mxu0 0.0
        %984 = vmatpush1.msra.mxu0 0.0
        %985 = vmatprep.subr.mxu0 0.0
        %986 = vmatpush1.msra.mxu0 0.0
        %987 = vmatprep.subr.mxu0 0.0
        %988 = vmatpush1.msra.mxu0 0.0
        %989 = vmatprep.subr.mxu0 0.0
        %990 = vmatpush1.msra.mxu0 0.0
        %991 = vmatprep.subr.mxu0 0.0
        %992 = vmatpush1.msra.mxu0 0.0
        %993 = vmatprep.subr.mxu0 0.0
        %994 = vmatpush1.msra.mxu0 0.0
        %995 = vmatprep.subr.mxu0 0.0
        %996 = vmatpush1.msra.mxu0 0.0
        %997 = vmatprep.subr.mxu0 0.0
        %998 = vmatpush1.msra.mxu0 0.0
        %999 = vmatprep.subr.mxu0 0.0
        %1000 = vmatpush1.msra.mxu0 0.0
        %1001 = vmatprep.subr.mxu0 0.0
        %1002 = vmatpush1.msra.mxu0 0.0
        %1003 = vmatprep.subr.mxu0 0.0
        %1004 = vmatpush1.msra.mxu0 0.0
        %1005 = vmatprep.subr.mxu0 0.0
        %1006 = vmatpush1.msra.mxu0 0.0
        %1007 = vmatprep.subr.mxu0 0.0
        %1008 = vmatpush1.msra.mxu0 0.0
        %1009 = vmatprep.subr.mxu0 0.0
        %1010 = vmatpush1.msra.mxu0 0.0
        %1011 = vmatprep.subr.mxu0 0.0
        %1012 = vmatpush1.msra.mxu0 0.0
        %1013 = vmatprep.subr.mxu0 0.0
        %1014 = vmatpush1.msra.mxu0 0.0
        %1015 = vmatprep.mubr.f32.mxu0 0.0
        %1016 = vmatmul.mubr.f32.gmra.mrb[0].mxu0 %v949
        %v1017 = vpop.f32.mrb[0].mxu0
        %v1018 = vadd.f32 0.0, %v1017
        %v1019 = vpop.f32.mrb[0].mxu0
        %1020 = vdwg.mxu0
        %1021 = vrot.lane.b32.xlu0 %v763, 64
        %v1022 = vpop.permute.xlu0 %1021
        %v1025 = vsel %vm769, %v944, 0
        %1027 = vmatprep.subr.mxu0 0.0
        %1028 = vmatpush1.msra.mxu0 %v1022
        %1029 = vmatprep.subr.mxu0 0.0
        %1030 = vmatpush1.msra.mxu0 0.0
        %1031 = vmatprep.subr.mxu0 0.0
        %1032 = vmatpush1.msra.mxu0 0.0
        %1033 = vmatprep.subr.mxu0 0.0
        %1034 = vmatpush1.msra.mxu0 0.0
        %1035 = vmatprep.subr.mxu0 0.0
        %1036 = vmatpush1.msra.mxu0 0.0
        %1037 = vmatprep.subr.mxu0 0.0
        %1038 = vmatpush1.msra.mxu0 0.0
        %1039 = vmatprep.subr.mxu0 0.0
        %1040 = vmatpush1.msra.mxu0 0.0
        %1041 = vmatprep.subr.mxu0 0.0
        %1042 = vmatpush1.msra.mxu0 0.0
        %1043 = vmatprep.subr.mxu0 0.0
        %1044 = vmatpush1.msra.mxu0 0.0
        %1045 = vmatprep.subr.mxu0 0.0
        %1046 = vmatpush1.msra.mxu0 0.0
        %1047 = vmatprep.subr.mxu0 0.0
        %1048 = vmatpush1.msra.mxu0 0.0
        %1049 = vmatprep.subr.mxu0 0.0
        %1050 = vmatpush1.msra.mxu0 0.0
        %1051 = vmatprep.subr.mxu0 0.0
        %1052 = vmatpush1.msra.mxu0 0.0
        %1053 = vmatprep.subr.mxu0 0.0
        %1054 = vmatpush1.msra.mxu0 0.0
        %1055 = vmatprep.subr.mxu0 0.0
        %1056 = vmatpush1.msra.mxu0 0.0
        %1057 = vmatprep.subr.mxu0 0.0
        %1058 = vmatpush1.msra.mxu0 0.0
        %1059 = vmatprep.subr.mxu0 0.0
        %1060 = vmatpush1.msra.mxu0 0.0
        %1061 = vmatprep.subr.mxu0 0.0
        %1062 = vmatpush1.msra.mxu0 0.0
        %1063 = vmatprep.subr.mxu0 0.0
        %1064 = vmatpush1.msra.mxu0 0.0
        %1065 = vmatprep.subr.mxu0 0.0
        %1066 = vmatpush1.msra.mxu0 0.0
        %1067 = vmatprep.subr.mxu0 0.0
        %1068 = vmatpush1.msra.mxu0 0.0
        %1069 = vmatprep.subr.mxu0 0.0
        %1070 = vmatpush1.msra.mxu0 0.0
        %1071 = vmatprep.subr.mxu0 0.0
        %1072 = vmatpush1.msra.mxu0 0.0
        %1073 = vmatprep.subr.mxu0 0.0
        %1074 = vmatpush1.msra.mxu0 0.0
        %1075 = vmatprep.subr.mxu0 0.0
        %1076 = vmatpush1.msra.mxu0 0.0
        %1077 = vmatprep.subr.mxu0 0.0
        %1078 = vmatpush1.msra.mxu0 0.0
        %1079 = vmatprep.subr.mxu0 0.0
        %1080 = vmatpush1.msra.mxu0 0.0
        %1081 = vmatprep.subr.mxu0 0.0
        %1082 = vmatpush1.msra.mxu0 0.0
        %1083 = vmatprep.subr.mxu0 0.0
        %1084 = vmatpush1.msra.mxu0 0.0
        %1085 = vmatprep.subr.mxu0 0.0
        %1086 = vmatpush1.msra.mxu0 0.0
        %1087 = vmatprep.subr.mxu0 0.0
        %1088 = vmatpush1.msra.mxu0 0.0
        %1089 = vmatprep.subr.mxu0 0.0
        %1090 = vmatpush1.msra.mxu0 0.0
        %1091 = vmatprep.mubr.f32.mxu0 0.0
        %1092 = vmatmul.mubr.f32.gmra.mrb[0].mxu0 %v1025
        %v1093 = vpop.f32.mrb[0].mxu0
        %v1094 = vadd.f32 0.0, %v1093
        %v1095 = vpop.f32.mrb[0].mxu0
        %1096 = vdwg.mxu0
        %1097 = vrot.lane.b32.xlu0 %v758, 120
        %v1098 = vpop.permute.xlu0 %1097
        %1099 = vrot.lane.b32.xlu0 %v758, 88
        %v1100 = vpop.permute.xlu0 %1099
        %v1101 = vsel %vm769, %v1098, 0
        %v1103 = vsel %vm769, %v1100, 0
        %1105 = vmatprep.subr.mxu0 0.0
        %1106 = vmatpush1.xpose.msra.mxu0 %v1103
        %1107 = vmatprep.subr.mxu0 0.0
        %1108 = vmatpush1.xpose.msra.mxu0 0.0
        %1109 = vmatprep.subr.mxu0 0.0
        %1110 = vmatpush1.xpose.msra.mxu0 0.0
        %1111 = vmatprep.subr.mxu0 0.0
        %1112 = vmatpush1.xpose.msra.mxu0 0.0
        %1113 = vmatprep.subr.mxu0 0.0
        %1114 = vmatpush1.xpose.msra.mxu0 0.0
        %1115 = vmatprep.subr.mxu0 0.0
        %1116 = vmatpush1.xpose.msra.mxu0 0.0
        %1117 = vmatprep.subr.mxu0 0.0
        %1118 = vmatpush1.xpose.msra.mxu0 0.0
        %1119 = vmatprep.subr.mxu0 0.0
        %1120 = vmatpush1.xpose.msra.mxu0 0.0
        %1121 = vmatprep.subr.mxu0 0.0
        %1122 = vmatpush1.xpose.msra.mxu0 0.0
        %1123 = vmatprep.subr.mxu0 0.0
        %1124 = vmatpush1.xpose.msra.mxu0 0.0
        %1125 = vmatprep.subr.mxu0 0.0
        %1126 = vmatpush1.xpose.msra.mxu0 0.0
        %1127 = vmatprep.subr.mxu0 0.0
        %1128 = vmatpush1.xpose.msra.mxu0 0.0
        %1129 = vmatprep.subr.mxu0 0.0
        %1130 = vmatpush1.xpose.msra.mxu0 0.0
        %1131 = vmatprep.subr.mxu0 0.0
        %1132 = vmatpush1.xpose.msra.mxu0 0.0
        %1133 = vmatprep.subr.mxu0 0.0
        %1134 = vmatpush1.xpose.msra.mxu0 0.0
        %1135 = vmatprep.subr.mxu0 0.0
        %1136 = vmatpush1.xpose.msra.mxu0 0.0
        %1137 = vmatprep.subr.mxu0 0.0
        %1138 = vmatpush1.xpose.msra.mxu0 0.0
        %1139 = vmatprep.subr.mxu0 0.0
        %1140 = vmatpush1.xpose.msra.mxu0 0.0
        %1141 = vmatprep.subr.mxu0 0.0
        %1142 = vmatpush1.xpose.msra.mxu0 0.0
        %1143 = vmatprep.subr.mxu0 0.0
        %1144 = vmatpush1.xpose.msra.mxu0 0.0
        %1145 = vmatprep.subr.mxu0 0.0
        %1146 = vmatpush1.xpose.msra.mxu0 0.0
        %1147 = vmatprep.subr.mxu0 0.0
        %1148 = vmatpush1.xpose.msra.mxu0 0.0
        %1149 = vmatprep.subr.mxu0 0.0
        %1150 = vmatpush1.xpose.msra.mxu0 0.0
        %1151 = vmatprep.subr.mxu0 0.0
        %1152 = vmatpush1.xpose.msra.mxu0 0.0
        %1153 = vmatprep.subr.mxu0 0.0
        %1154 = vmatpush1.xpose.msra.mxu0 0.0
        %1155 = vmatprep.subr.mxu0 0.0
        %1156 = vmatpush1.xpose.msra.mxu0 0.0
        %1157 = vmatprep.subr.mxu0 0.0
        %1158 = vmatpush1.xpose.msra.mxu0 0.0
        %1159 = vmatprep.subr.mxu0 0.0
        %1160 = vmatpush1.xpose.msra.mxu0 0.0
        %1161 = vmatprep.subr.mxu0 0.0
        %1162 = vmatpush1.xpose.msra.mxu0 0.0
        %1163 = vmatprep.subr.mxu0 0.0
        %1164 = vmatpush1.xpose.msra.mxu0 0.0
        %1165 = vmatprep.subr.mxu0 0.0
        %1166 = vmatpush1.xpose.msra.mxu0 0.0
        %1167 = vmatprep.subr.mxu0 0.0
        %1168 = vmatpush1.xpose.msra.mxu0 0.0
        %1169 = vmatprep.mubr.f32.mxu0 0.0
        %1170 = vmatmul.mubr.f32.gmra.mrb[0].mxu0 %v1101
        %v1171 = vpop.f32.mrb[0].mxu0
        %v1172 = vadd.f32 0.0, %v1171
        %v1173 = vpop.f32.mrb[0].mxu0
        %1174 = vdwg.mxu0
        %1175 = vrot.lane.b32.xlu0 %v763, 120
        %v1176 = vpop.permute.xlu0 %1175
        %1177 = vrot.lane.b32.xlu0 %v763, 88
        %v1178 = vpop.permute.xlu0 %1177
        %v1179 = vsel %vm769, %v1176, 0
        %v1181 = vsel %vm769, %v1178, 0
        %1183 = vmatprep.subr.mxu0 0.0
        %1184 = vmatpush1.xpose.msra.mxu0 %v1181
        %1185 = vmatprep.subr.mxu0 0.0
        %1186 = vmatpush1.xpose.msra.mxu0 0.0
        %1187 = vmatprep.subr.mxu0 0.0
        %1188 = vmatpush1.xpose.msra.mxu0 0.0
        %1189 = vmatprep.subr.mxu0 0.0
        %1190 = vmatpush1.xpose.msra.mxu0 0.0
        %1191 = vmatprep.subr.mxu0 0.0
        %1192 = vmatpush1.xpose.msra.mxu0 0.0
        %1193 = vmatprep.subr.mxu0 0.0
        %1194 = vmatpush1.xpose.msra.mxu0 0.0
        %1195 = vmatprep.subr.mxu0 0.0
        %1196 = vmatpush1.xpose.msra.mxu0 0.0
        %1197 = vmatprep.subr.mxu0 0.0
        %1198 = vmatpush1.xpose.msra.mxu0 0.0
        %1199 = vmatprep.subr.mxu0 0.0
        %1200 = vmatpush1.xpose.msra.mxu0 0.0
        %1201 = vmatprep.subr.mxu0 0.0
        %1202 = vmatpush1.xpose.msra.mxu0 0.0
        %1203 = vmatprep.subr.mxu0 0.0
        %1204 = vmatpush1.xpose.msra.mxu0 0.0
        %1205 = vmatprep.subr.mxu0 0.0
        %1206 = vmatpush1.xpose.msra.mxu0 0.0
        %1207 = vmatprep.subr.mxu0 0.0
        %1208 = vmatpush1.xpose.msra.mxu0 0.0
        %1209 = vmatprep.subr.mxu0 0.0
        %1210 = vmatpush1.xpose.msra.mxu0 0.0
        %1211 = vmatprep.subr.mxu0 0.0
        %1212 = vmatpush1.xpose.msra.mxu0 0.0
        %1213 = vmatprep.subr.mxu0 0.0
        %1214 = vmatpush1.xpose.msra.mxu0 0.0
        %1215 = vmatprep.subr.mxu0 0.0
        %1216 = vmatpush1.xpose.msra.mxu0 0.0
        %1217 = vmatprep.subr.mxu0 0.0
        %1218 = vmatpush1.xpose.msra.mxu0 0.0
        %1219 = vmatprep.subr.mxu0 0.0
        %1220 = vmatpush1.xpose.msra.mxu0 0.0
        %1221 = vmatprep.subr.mxu0 0.0
        %1222 = vmatpush1.xpose.msra.mxu0 0.0
        %1223 = vmatprep.subr.mxu0 0.0
        %1224 = vmatpush1.xpose.msra.mxu0 0.0
        %1225 = vmatprep.subr.mxu0 0.0
        %1226 = vmatpush1.xpose.msra.mxu0 0.0
        %1227 = vmatprep.subr.mxu0 0.0
        %1228 = vmatpush1.xpose.msra.mxu0 0.0
        %1229 = vmatprep.subr.mxu0 0.0
        %1230 = vmatpush1.xpose.msra.mxu0 0.0
        %1231 = vmatprep.subr.mxu0 0.0
        %1232 = vmatpush1.xpose.msra.mxu0 0.0
        %1233 = vmatprep.subr.mxu0 0.0
        %1234 = vmatpush1.xpose.msra.mxu0 0.0
        %1235 = vmatprep.subr.mxu0 0.0
        %1236 = vmatpush1.xpose.msra.mxu0 0.0
        %1237 = vmatprep.subr.mxu0 0.0
        %1238 = vmatpush1.xpose.msra.mxu0 0.0
        %1239 = vmatprep.subr.mxu0 0.0
        %1240 = vmatpush1.xpose.msra.mxu0 0.0
        %1241 = vmatprep.subr.mxu0 0.0
        %1242 = vmatpush1.xpose.msra.mxu0 0.0
        %1243 = vmatprep.subr.mxu0 0.0
        %1244 = vmatpush1.xpose.msra.mxu0 0.0
        %1245 = vmatprep.subr.mxu0 0.0
        %1246 = vmatpush1.xpose.msra.mxu0 0.0
        %1247 = vmatprep.mubr.f32.mxu0 0.0
        %1248 = vmatmul.mubr.f32.gmra.mrb[0].mxu0 %v1179
        %v1249 = vpop.f32.mrb[0].mxu0
        %v1250 = vadd.f32 0.0, %v1249
        %v1251 = vpop.f32.mrb[0].mxu0
        %1252 = vdwg.mxu0
        %v1253 = vmul.f32 %v1172, 0.35355338
        %v1254 = vmul.f32 %v1250, 0.35355338
        %v1255 = vsel %vm769, %v1253, -inf
        %1256 = vmax.xlane.f32.xlu0 %v1255
        %v1257 = vpop.xlane.xlu0 %1256
        %v1258 = vsel %vm769, %v1254, -inf
        %1259 = vmax.xlane.f32.xlu0 %v1258
        %v1260 = vpop.xlane.xlu0 %1259
        %v1261 = vsub.f32 %v1253, %v1257
        %v1262 = vsub.f32 %v1254, %v1260
        %v1263 = vmul.f32 %v1261, 1.442695
        %v1264 = vpow.pop %v1263
        %v1265 = vmul.f32 %v1262, 1.442695
        %v1266 = vpow.pop %v1265
        %v1267 = vsel %vm769, %v1264, 0.0
        %1268 = vadd.xlane.f32.xlu0 %v1267
        %v1269 = vpop.xlane.xlu0 %1268
        %v1270 = vsel %vm769, %v1266, 0.0
        %1271 = vadd.xlane.f32.xlu0 %v1270
        %v1272 = vpop.xlane.xlu0 %1271
        %v1273 = vrcp.pop %v1269
        %v1274 = vrcp.pop %v1272
        %v1275 = vmul.f32 %v1264, %v1273
        %v1276 = vmul.f32 %v1266, %v1274
        %1277 = vrot.lane.b32.xlu0 %v758, 56
        %v1278 = vpop.permute.xlu0 %1277
        %v1281 = vsel %vm769, %v1275, 0
        %1283 = vmatprep.subr.mxu0 0.0
        %1284 = vmatpush1.msra.mxu0 %v1278
        %1285 = vmatprep.subr.mxu0 0.0
        %1286 = vmatpush1.msra.mxu0 0.0
        %1287 = vmatprep.subr.mxu0 0.0
        %1288 = vmatpush1.msra.mxu0 0.0
        %1289 = vmatprep.subr.mxu0 0.0
        %1290 = vmatpush1.msra.mxu0 0.0
        %1291 = vmatprep.subr.mxu0 0.0
        %1292 = vmatpush1.msra.mxu0 0.0
        %1293 = vmatprep.subr.mxu0 0.0
        %1294 = vmatpush1.msra.mxu0 0.0
        %1295 = vmatprep.subr.mxu0 0.0
        %1296 = vmatpush1.msra.mxu0 0.0
        %1297 = vmatprep.subr.mxu0 0.0
        %1298 = vmatpush1.msra.mxu0 0.0
        %1299 = vmatprep.subr.mxu0 0.0
        %1300 = vmatpush1.msra.mxu0 0.0
        %1301 = vmatprep.subr.mxu0 0.0
        %1302 = vmatpush1.msra.mxu0 0.0
        %1303 = vmatprep.subr.mxu0 0.0
        %1304 = vmatpush1.msra.mxu0 0.0
        %1305 = vmatprep.subr.mxu0 0.0
        %1306 = vmatpush1.msra.mxu0 0.0
        %1307 = vmatprep.subr.mxu0 0.0
        %1308 = vmatpush1.msra.mxu0 0.0
        %1309 = vmatprep.subr.mxu0 0.0
        %1310 = vmatpush1.msra.mxu0 0.0
        %1311 = vmatprep.subr.mxu0 0.0
        %1312 = vmatpush1.msra.mxu0 0.0
        %1313 = vmatprep.subr.mxu0 0.0
        %1314 = vmatpush1.msra.mxu0 0.0
        %1315 = vmatprep.subr.mxu0 0.0
        %1316 = vmatpush1.msra.mxu0 0.0
        %1317 = vmatprep.subr.mxu0 0.0
        %1318 = vmatpush1.msra.mxu0 0.0
        %1319 = vmatprep.subr.mxu0 0.0
        %1320 = vmatpush1.msra.mxu0 0.0
        %1321 = vmatprep.subr.mxu0 0.0
        %1322 = vmatpush1.msra.mxu0 0.0
        %1323 = vmatprep.subr.mxu0 0.0
        %1324 = vmatpush1.msra.mxu0 0.0
        %1325 = vmatprep.subr.mxu0 0.0
        %1326 = vmatpush1.msra.mxu0 0.0
        %1327 = vmatprep.subr.mxu0 0.0
        %1328 = vmatpush1.msra.mxu0 0.0
        %1329 = vmatprep.subr.mxu0 0.0
        %1330 = vmatpush1.msra.mxu0 0.0
        %1331 = vmatprep.subr.mxu0 0.0
        %1332 = vmatpush1.msra.mxu0 0.0
        %1333 = vmatprep.subr.mxu0 0.0
        %1334 = vmatpush1.msra.mxu0 0.0
        %1335 = vmatprep.subr.mxu0 0.0
        %1336 = vmatpush1.msra.mxu0 0.0
        %1337 = vmatprep.subr.mxu0 0.0
        %1338 = vmatpush1.msra.mxu0 0.0
        %1339 = vmatprep.subr.mxu0 0.0
        %1340 = vmatpush1.msra.mxu0 0.0
        %1341 = vmatprep.subr.mxu0 0.0
        %1342 = vmatpush1.msra.mxu0 0.0
        %1343 = vmatprep.subr.mxu0 0.0
        %1344 = vmatpush1.msra.mxu0 0.0
        %1345 = vmatprep.subr.mxu0 0.0
        %1346 = vmatpush1.msra.mxu0 0.0
        %1347 = vmatprep.mubr.f32.mxu0 0.0
        %1348 = vmatmul.mubr.f32.gmra.mrb[0].mxu0 %v1281
        %v1349 = vpop.f32.mrb[0].mxu0
        %v1350 = vadd.f32 0.0, %v1349
        %v1351 = vpop.f32.mrb[0].mxu0
        %1352 = vdwg.mxu0
        %1353 = vrot.lane.b32.xlu0 %v763, 56
        %v1354 = vpop.permute.xlu0 %1353
        %v1357 = vsel %vm769, %v1276, 0
        %1359 = vmatprep.subr.mxu0 0.0
        %1360 = vmatpush1.msra.mxu0 %v1354
        %1361 = vmatprep.subr.mxu0 0.0
        %1362 = vmatpush1.msra.mxu0 0.0
        %1363 = vmatprep.subr.mxu0 0.0
        %1364 = vmatpush1.msra.mxu0 0.0
        %1365 = vmatprep.subr.mxu0 0.0
        %1366 = vmatpush1.msra.mxu0 0.0
        %1367 = vmatprep.subr.mxu0 0.0
        %1368 = vmatpush1.msra.mxu0 0.0
        %1369 = vmatprep.subr.mxu0 0.0
        %1370 = vmatpush1.msra.mxu0 0.0
        %1371 = vmatprep.subr.mxu0 0.0
        %1372 = vmatpush1.msra.mxu0 0.0
        %1373 = vmatprep.subr.mxu0 0.0
        %1374 = vmatpush1.msra.mxu0 0.0
        %1375 = vmatprep.subr.mxu0 0.0
        %1376 = vmatpush1.msra.mxu0 0.0
        %1377 = vmatprep.subr.mxu0 0.0
        %1378 = vmatpush1.msra.mxu0 0.0
        %1379 = vmatprep.subr.mxu0 0.0
        %1380 = vmatpush1.msra.mxu0 0.0
        %1381 = vmatprep.subr.mxu0 0.0
        %1382 = vmatpush1.msra.mxu0 0.0
        %1383 = vmatprep.subr.mxu0 0.0
        %1384 = vmatpush1.msra.mxu0 0.0
        %1385 = vmatprep.subr.mxu0 0.0
        %1386 = vmatpush1.msra.mxu0 0.0
        %1387 = vmatprep.subr.mxu0 0.0
        %1388 = vmatpush1.msra.mxu0 0.0
        %1389 = vmatprep.subr.mxu0 0.0
        %1390 = vmatpush1.msra.mxu0 0.0
        %1391 = vmatprep.subr.mxu0 0.0
        %1392 = vmatpush1.msra.mxu0 0.0
        %1393 = vmatprep.subr.mxu0 0.0
        %1394 = vmatpush1.msra.mxu0 0.0
        %1395 = vmatprep.subr.mxu0 0.0
        %1396 = vmatpush1.msra.mxu0 0.0
        %1397 = vmatprep.subr.mxu0 0.0
        %1398 = vmatpush1.msra.mxu0 0.0
        %1399 = vmatprep.subr.mxu0 0.0
        %1400 = vmatpush1.msra.mxu0 0.0
        %1401 = vmatprep.subr.mxu0 0.0
        %1402 = vmatpush1.msra.mxu0 0.0
        %1403 = vmatprep.subr.mxu0 0.0
        %1404 = vmatpush1.msra.mxu0 0.0
        %1405 = vmatprep.subr.mxu0 0.0
        %1406 = vmatpush1.msra.mxu0 0.0
        %1407 = vmatprep.subr.mxu0 0.0
        %1408 = vmatpush1.msra.mxu0 0.0
        %1409 = vmatprep.subr.mxu0 0.0
        %1410 = vmatpush1.msra.mxu0 0.0
        %1411 = vmatprep.subr.mxu0 0.0
        %1412 = vmatpush1.msra.mxu0 0.0
        %1413 = vmatprep.subr.mxu0 0.0
        %1414 = vmatpush1.msra.mxu0 0.0
        %1415 = vmatprep.subr.mxu0 0.0
        %1416 = vmatpush1.msra.mxu0 0.0
        %1417 = vmatprep.subr.mxu0 0.0
        %1418 = vmatpush1.msra.mxu0 0.0
        %1419 = vmatprep.subr.mxu0 0.0
        %1420 = vmatpush1.msra.mxu0 0.0
        %1421 = vmatprep.subr.mxu0 0.0
        %1422 = vmatpush1.msra.mxu0 0.0
        %1423 = vmatprep.mubr.f32.mxu0 0.0
        %1424 = vmatmul.mubr.f32.gmra.mrb[0].mxu0 %v1357
        %v1425 = vpop.f32.mrb[0].mxu0
        %v1426 = vadd.f32 0.0, %v1425
        %v1427 = vpop.f32.mrb[0].mxu0
        %1428 = vdwg.mxu0
        %1429 = vrot.lane.b32.xlu0 %v758, 112
        %v1430 = vpop.permute.xlu0 %1429
        %1431 = vrot.lane.b32.xlu0 %v758, 80
        %v1432 = vpop.permute.xlu0 %1431
        %v1433 = vsel %vm769, %v1430, 0
        %v1435 = vsel %vm769, %v1432, 0
        %1437 = vmatprep.subr.mxu0 0.0
        %1438 = vmatpush1.xpose.msra.mxu0 %v1435
        %1439 = vmatprep.subr.mxu0 0.0
        %1440 = vmatpush1.xpose.msra.mxu0 0.0
        %1441 = vmatprep.subr.mxu0 0.0
        %1442 = vmatpush1.xpose.msra.mxu0 0.0
        %1443 = vmatprep.subr.mxu0 0.0
        %1444 = vmatpush1.xpose.msra.mxu0 0.0
        %1445 = vmatprep.subr.mxu0 0.0
        %1446 = vmatpush1.xpose.msra.mxu0 0.0
        %1447 = vmatprep.subr.mxu0 0.0
        %1448 = vmatpush1.xpose.msra.mxu0 0.0
        %1449 = vmatprep.subr.mxu0 0.0
        %1450 = vmatpush1.xpose.msra.mxu0 0.0
        %1451 = vmatprep.subr.mxu0 0.0
        %1452 = vmatpush1.xpose.msra.mxu0 0.0
        %1453 = vmatprep.subr.mxu0 0.0
        %1454 = vmatpush1.xpose.msra.mxu0 0.0
        %1455 = vmatprep.subr.mxu0 0.0
        %1456 = vmatpush1.xpose.msra.mxu0 0.0
        %1457 = vmatprep.subr.mxu0 0.0
        %1458 = vmatpush1.xpose.msra.mxu0 0.0
        %1459 = vmatprep.subr.mxu0 0.0
        %1460 = vmatpush1.xpose.msra.mxu0 0.0
        %1461 = vmatprep.subr.mxu0 0.0
        %1462 = vmatpush1.xpose.msra.mxu0 0.0
        %1463 = vmatprep.subr.mxu0 0.0
        %1464 = vmatpush1.xpose.msra.mxu0 0.0
        %1465 = vmatprep.subr.mxu0 0.0
        %1466 = vmatpush1.xpose.msra.mxu0 0.0
        %1467 = vmatprep.subr.mxu0 0.0
        %1468 = vmatpush1.xpose.msra.mxu0 0.0
        %1469 = vmatprep.subr.mxu0 0.0
        %1470 = vmatpush1.xpose.msra.mxu0 0.0
        %1471 = vmatprep.subr.mxu0 0.0
        %1472 = vmatpush1.xpose.msra.mxu0 0.0
        %1473 = vmatprep.subr.mxu0 0.0
        %1474 = vmatpush1.xpose.msra.mxu0 0.0
        %1475 = vmatprep.subr.mxu0 0.0
        %1476 = vmatpush1.xpose.msra.mxu0 0.0
        %1477 = vmatprep.subr.mxu0 0.0
        %1478 = vmatpush1.xpose.msra.mxu0 0.0
        %1479 = vmatprep.subr.mxu0 0.0
        %1480 = vmatpush1.xpose.msra.mxu0 0.0
        %1481 = vmatprep.subr.mxu0 0.0
        %1482 = vmatpush1.xpose.msra.mxu0 0.0
        %1483 = vmatprep.subr.mxu0 0.0
        %1484 = vmatpush1.xpose.msra.mxu0 0.0
        %1485 = vmatprep.subr.mxu0 0.0
        %1486 = vmatpush1.xpose.msra.mxu0 0.0
        %1487 = vmatprep.subr.mxu0 0.0
        %1488 = vmatpush1.xpose.msra.mxu0 0.0
        %1489 = vmatprep.subr.mxu0 0.0
        %1490 = vmatpush1.xpose.msra.mxu0 0.0
        %1491 = vmatprep.subr.mxu0 0.0
        %1492 = vmatpush1.xpose.msra.mxu0 0.0
        %1493 = vmatprep.subr.mxu0 0.0
        %1494 = vmatpush1.xpose.msra.mxu0 0.0
        %1495 = vmatprep.subr.mxu0 0.0
        %1496 = vmatpush1.xpose.msra.mxu0 0.0
        %1497 = vmatprep.subr.mxu0 0.0
        %1498 = vmatpush1.xpose.msra.mxu0 0.0
        %1499 = vmatprep.subr.mxu0 0.0
        %1500 = vmatpush1.xpose.msra.mxu0 0.0
        %1501 = vmatprep.mubr.f32.mxu0 0.0
        %1502 = vmatmul.mubr.f32.gmra.mrb[0].mxu0 %v1433
        %v1503 = vpop.f32.mrb[0].mxu0
        %v1504 = vadd.f32 0.0, %v1503
        %v1505 = vpop.f32.mrb[0].mxu0
        %1506 = vdwg.mxu0
        %1507 = vrot.lane.b32.xlu0 %v763, 112
        %v1508 = vpop.permute.xlu0 %1507
        %1509 = vrot.lane.b32.xlu0 %v763, 80
        %v1510 = vpop.permute.xlu0 %1509
        %v1511 = vsel %vm769, %v1508, 0
        %v1513 = vsel %vm769, %v1510, 0
        %1515 = vmatprep.subr.mxu0 0.0
        %1516 = vmatpush1.xpose.msra.mxu0 %v1513
        %1517 = vmatprep.subr.mxu0 0.0
        %1518 = vmatpush1.xpose.msra.mxu0 0.0
        %1519 = vmatprep.subr.mxu0 0.0
        %1520 = vmatpush1.xpose.msra.mxu0 0.0
        %1521 = vmatprep.subr.mxu0 0.0
        %1522 = vmatpush1.xpose.msra.mxu0 0.0
        %1523 = vmatprep.subr.mxu0 0.0
        %1524 = vmatpush1.xpose.msra.mxu0 0.0
        %1525 = vmatprep.subr.mxu0 0.0
        %1526 = vmatpush1.xpose.msra.mxu0 0.0
        %1527 = vmatprep.subr.mxu0 0.0
        %1528 = vmatpush1.xpose.msra.mxu0 0.0
        %1529 = vmatprep.subr.mxu0 0.0
        %1530 = vmatpush1.xpose.msra.mxu0 0.0
        %1531 = vmatprep.subr.mxu0 0.0
        %1532 = vmatpush1.xpose.msra.mxu0 0.0
        %1533 = vmatprep.subr.mxu0 0.0
        %1534 = vmatpush1.xpose.msra.mxu0 0.0
        %1535 = vmatprep.subr.mxu0 0.0
        %1536 = vmatpush1.xpose.msra.mxu0 0.0
        %1537 = vmatprep.subr.mxu0 0.0
        %1538 = vmatpush1.xpose.msra.mxu0 0.0
        %1539 = vmatprep.subr.mxu0 0.0
        %1540 = vmatpush1.xpose.msra.mxu0 0.0
        %1541 = vmatprep.subr.mxu0 0.0
        %1542 = vmatpush1.xpose.msra.mxu0 0.0
        %1543 = vmatprep.subr.mxu0 0.0
        %1544 = vmatpush1.xpose.msra.mxu0 0.0
        %1545 = vmatprep.subr.mxu0 0.0
        %1546 = vmatpush1.xpose.msra.mxu0 0.0
        %1547 = vmatprep.subr.mxu0 0.0
        %1548 = vmatpush1.xpose.msra.mxu0 0.0
        %1549 = vmatprep.subr.mxu0 0.0
        %1550 = vmatpush1.xpose.msra.mxu0 0.0
        %1551 = vmatprep.subr.mxu0 0.0
        %1552 = vmatpush1.xpose.msra.mxu0 0.0
        %1553 = vmatprep.subr.mxu0 0.0
        %1554 = vmatpush1.xpose.msra.mxu0 0.0
        %1555 = vmatprep.subr.mxu0 0.0
        %1556 = vmatpush1.xpose.msra.mxu0 0.0
        %1557 = vmatprep.subr.mxu0 0.0
        %1558 = vmatpush1.xpose.msra.mxu0 0.0
        %1559 = vmatprep.subr.mxu0 0.0
        %1560 = vmatpush1.xpose.msra.mxu0 0.0
        %1561 = vmatprep.subr.mxu0 0.0
        %1562 = vmatpush1.xpose.msra.mxu0 0.0
        %1563 = vmatprep.subr.mxu0 0.0
        %1564 = vmatpush1.xpose.msra.mxu0 0.0
        %1565 = vmatprep.subr.mxu0 0.0
        %1566 = vmatpush1.xpose.msra.mxu0 0.0
        %1567 = vmatprep.subr.mxu0 0.0
        %1568 = vmatpush1.xpose.msra.mxu0 0.0
        %1569 = vmatprep.subr.mxu0 0.0
        %1570 = vmatpush1.xpose.msra.mxu0 0.0
        %1571 = vmatprep.subr.mxu0 0.0
        %1572 = vmatpush1.xpose.msra.mxu0 0.0
        %1573 = vmatprep.subr.mxu0 0.0
        %1574 = vmatpush1.xpose.msra.mxu0 0.0
        %1575 = vmatprep.subr.mxu0 0.0
        %1576 = vmatpush1.xpose.msra.mxu0 0.0
        %1577 = vmatprep.subr.mxu0 0.0
        %1578 = vmatpush1.xpose.msra.mxu0 0.0
        %1579 = vmatprep.mubr.f32.mxu0 0.0
        %1580 = vmatmul.mubr.f32.gmra.mrb[0].mxu0 %v1511
        %v1581 = vpop.f32.mrb[0].mxu0
        %v1582 = vadd.f32 0.0, %v1581
        %v1583 = vpop.f32.mrb[0].mxu0
        %1584 = vdwg.mxu0
        %v1585 = vmul.f32 %v1504, 0.35355338
        %v1586 = vmul.f32 %v1582, 0.35355338
        %v1587 = vsel %vm769, %v1585, -inf
        %1588 = vmax.xlane.f32.xlu0 %v1587
        %v1589 = vpop.xlane.xlu0 %1588
        %v1590 = vsel %vm769, %v1586, -inf
        %1591 = vmax.xlane.f32.xlu0 %v1590
        %v1592 = vpop.xlane.xlu0 %1591
        %v1593 = vsub.f32 %v1585, %v1589
        %v1594 = vsub.f32 %v1586, %v1592
        %v1595 = vmul.f32 %v1593, 1.442695
        %v1596 = vpow.pop %v1595
        %v1597 = vmul.f32 %v1594, 1.442695
        %v1598 = vpow.pop %v1597
        %v1599 = vsel %vm769, %v1596, 0.0
        %1600 = vadd.xlane.f32.xlu0 %v1599
        %v1601 = vpop.xlane.xlu0 %1600
        %v1602 = vsel %vm769, %v1598, 0.0
        %1603 = vadd.xlane.f32.xlu0 %v1602
        %v1604 = vpop.xlane.xlu0 %1603
        %v1605 = vrcp.pop %v1601
        %v1606 = vrcp.pop %v1604
        %v1607 = vmul.f32 %v1596, %v1605
        %v1608 = vmul.f32 %v1598, %v1606
        %1609 = vrot.lane.b32.xlu0 %v758, 48
        %v1610 = vpop.permute.xlu0 %1609
        %v1613 = vsel %vm769, %v1607, 0
        %1615 = vmatprep.subr.mxu0 0.0
        %1616 = vmatpush1.msra.mxu0 %v1610
        %1617 = vmatprep.subr.mxu0 0.0
        %1618 = vmatpush1.msra.mxu0 0.0
        %1619 = vmatprep.subr.mxu0 0.0
        %1620 = vmatpush1.msra.mxu0 0.0
        %1621 = vmatprep.subr.mxu0 0.0
        %1622 = vmatpush1.msra.mxu0 0.0
        %1623 = vmatprep.subr.mxu0 0.0
        %1624 = vmatpush1.msra.mxu0 0.0
        %1625 = vmatprep.subr.mxu0 0.0
        %1626 = vmatpush1.msra.mxu0 0.0
        %1627 = vmatprep.subr.mxu0 0.0
        %1628 = vmatpush1.msra.mxu0 0.0
        %1629 = vmatprep.subr.mxu0 0.0
        %1630 = vmatpush1.msra.mxu0 0.0
        %1631 = vmatprep.subr.mxu0 0.0
        %1632 = vmatpush1.msra.mxu0 0.0
        %1633 = vmatprep.subr.mxu0 0.0
        %1634 = vmatpush1.msra.mxu0 0.0
        %1635 = vmatprep.subr.mxu0 0.0
        %1636 = vmatpush1.msra.mxu0 0.0
        %1637 = vmatprep.subr.mxu0 0.0
        %1638 = vmatpush1.msra.mxu0 0.0
        %1639 = vmatprep.subr.mxu0 0.0
        %1640 = vmatpush1.msra.mxu0 0.0
        %1641 = vmatprep.subr.mxu0 0.0
        %1642 = vmatpush1.msra.mxu0 0.0
        %1643 = vmatprep.subr.mxu0 0.0
        %1644 = vmatpush1.msra.mxu0 0.0
        %1645 = vmatprep.subr.mxu0 0.0
        %1646 = vmatpush1.msra.mxu0 0.0
        %1647 = vmatprep.subr.mxu0 0.0
        %1648 = vmatpush1.msra.mxu0 0.0
        %1649 = vmatprep.subr.mxu0 0.0
        %1650 = vmatpush1.msra.mxu0 0.0
        %1651 = vmatprep.subr.mxu0 0.0
        %1652 = vmatpush1.msra.mxu0 0.0
        %1653 = vmatprep.subr.mxu0 0.0
        %1654 = vmatpush1.msra.mxu0 0.0
        %1655 = vmatprep.subr.mxu0 0.0
        %1656 = vmatpush1.msra.mxu0 0.0
        %1657 = vmatprep.subr.mxu0 0.0
        %1658 = vmatpush1.msra.mxu0 0.0
        %1659 = vmatprep.subr.mxu0 0.0
        %1660 = vmatpush1.msra.mxu0 0.0
        %1661 = vmatprep.subr.mxu0 0.0
        %1662 = vmatpush1.msra.mxu0 0.0
        %1663 = vmatprep.subr.mxu0 0.0
        %1664 = vmatpush1.msra.mxu0 0.0
        %1665 = vmatprep.subr.mxu0 0.0
        %1666 = vmatpush1.msra.mxu0 0.0
        %1667 = vmatprep.subr.mxu0 0.0
        %1668 = vmatpush1.msra.mxu0 0.0
        %1669 = vmatprep.subr.mxu0 0.0
        %1670 = vmatpush1.msra.mxu0 0.0
        %1671 = vmatprep.subr.mxu0 0.0
        %1672 = vmatpush1.msra.mxu0 0.0
        %1673 = vmatprep.subr.mxu0 0.0
        %1674 = vmatpush1.msra.mxu0 0.0
        %1675 = vmatprep.subr.mxu0 0.0
        %1676 = vmatpush1.msra.mxu0 0.0
        %1677 = vmatprep.subr.mxu0 0.0
        %1678 = vmatpush1.msra.mxu0 0.0
        %1679 = vmatprep.mubr.f32.mxu0 0.0
        %1680 = vmatmul.mubr.f32.gmra.mrb[0].mxu0 %v1613
        %v1681 = vpop.f32.mrb[0].mxu0
        %v1682 = vadd.f32 0.0, %v1681
        %v1683 = vpop.f32.mrb[0].mxu0
        %1684 = vdwg.mxu0
        %1685 = vrot.lane.b32.xlu0 %v763, 48
        %v1686 = vpop.permute.xlu0 %1685
        %v1689 = vsel %vm769, %v1608, 0
        %1691 = vmatprep.subr.mxu0 0.0
        %1692 = vmatpush1.msra.mxu0 %v1686
        %1693 = vmatprep.subr.mxu0 0.0
        %1694 = vmatpush1.msra.mxu0 0.0
        %1695 = vmatprep.subr.mxu0 0.0
        %1696 = vmatpush1.msra.mxu0 0.0
        %1697 = vmatprep.subr.mxu0 0.0
        %1698 = vmatpush1.msra.mxu0 0.0
        %1699 = vmatprep.subr.mxu0 0.0
        %1700 = vmatpush1.msra.mxu0 0.0
        %1701 = vmatprep.subr.mxu0 0.0
        %1702 = vmatpush1.msra.mxu0 0.0
        %1703 = vmatprep.subr.mxu0 0.0
        %1704 = vmatpush1.msra.mxu0 0.0
        %1705 = vmatprep.subr.mxu0 0.0
        %1706 = vmatpush1.msra.mxu0 0.0
        %1707 = vmatprep.subr.mxu0 0.0
        %1708 = vmatpush1.msra.mxu0 0.0
        %1709 = vmatprep.subr.mxu0 0.0
        %1710 = vmatpush1.msra.mxu0 0.0
        %1711 = vmatprep.subr.mxu0 0.0
        %1712 = vmatpush1.msra.mxu0 0.0
        %1713 = vmatprep.subr.mxu0 0.0
        %1714 = vmatpush1.msra.mxu0 0.0
        %1715 = vmatprep.subr.mxu0 0.0
        %1716 = vmatpush1.msra.mxu0 0.0
        %1717 = vmatprep.subr.mxu0 0.0
        %1718 = vmatpush1.msra.mxu0 0.0
        %1719 = vmatprep.subr.mxu0 0.0
        %1720 = vmatpush1.msra.mxu0 0.0
        %1721 = vmatprep.subr.mxu0 0.0
        %1722 = vmatpush1.msra.mxu0 0.0
        %1723 = vmatprep.subr.mxu0 0.0
        %1724 = vmatpush1.msra.mxu0 0.0
        %1725 = vmatprep.subr.mxu0 0.0
        %1726 = vmatpush1.msra.mxu0 0.0
        %1727 = vmatprep.subr.mxu0 0.0
        %1728 = vmatpush1.msra.mxu0 0.0
        %1729 = vmatprep.subr.mxu0 0.0
        %1730 = vmatpush1.msra.mxu0 0.0
        %1731 = vmatprep.subr.mxu0 0.0
        %1732 = vmatpush1.msra.mxu0 0.0
        %1733 = vmatprep.subr.mxu0 0.0
        %1734 = vmatpush1.msra.mxu0 0.0
        %1735 = vmatprep.subr.mxu0 0.0
        %1736 = vmatpush1.msra.mxu0 0.0
        %1737 = vmatprep.subr.mxu0 0.0
        %1738 = vmatpush1.msra.mxu0 0.0
        %1739 = vmatprep.subr.mxu0 0.0
        %1740 = vmatpush1.msra.mxu0 0.0
        %1741 = vmatprep.subr.mxu0 0.0
        %1742 = vmatpush1.msra.mxu0 0.0
        %1743 = vmatprep.subr.mxu0 0.0
        %1744 = vmatpush1.msra.mxu0 0.0
        %1745 = vmatprep.subr.mxu0 0.0
        %1746 = vmatpush1.msra.mxu0 0.0
        %1747 = vmatprep.subr.mxu0 0.0
        %1748 = vmatpush1.msra.mxu0 0.0
        %1749 = vmatprep.subr.mxu0 0.0
        %1750 = vmatpush1.msra.mxu0 0.0
        %1751 = vmatprep.subr.mxu0 0.0
        %1752 = vmatpush1.msra.mxu0 0.0
        %1753 = vmatprep.subr.mxu0 0.0
        %1754 = vmatpush1.msra.mxu0 0.0
        %1755 = vmatprep.mubr.f32.mxu0 0.0
        %1756 = vmatmul.mubr.f32.gmra.mrb[0].mxu0 %v1689
        %v1757 = vpop.f32.mrb[0].mxu0
        %v1758 = vadd.f32 0.0, %v1757
        %v1759 = vpop.f32.mrb[0].mxu0
        %1760 = vdwg.mxu0
        %1761 = vrot.lane.b32.xlu0 %v758, 104
        %v1762 = vpop.permute.xlu0 %1761
        %1763 = vrot.lane.b32.xlu0 %v758, 72
        %v1764 = vpop.permute.xlu0 %1763
        %v1765 = vsel %vm769, %v1762, 0
        %v1767 = vsel %vm769, %v1764, 0
        %1769 = vmatprep.subr.mxu0 0.0
        %1770 = vmatpush1.xpose.msra.mxu0 %v1767
        %1771 = vmatprep.subr.mxu0 0.0
        %1772 = vmatpush1.xpose.msra.mxu0 0.0
        %1773 = vmatprep.subr.mxu0 0.0
        %1774 = vmatpush1.xpose.msra.mxu0 0.0
        %1775 = vmatprep.subr.mxu0 0.0
        %1776 = vmatpush1.xpose.msra.mxu0 0.0
        %1777 = vmatprep.subr.mxu0 0.0
        %1778 = vmatpush1.xpose.msra.mxu0 0.0
        %1779 = vmatprep.subr.mxu0 0.0
        %1780 = vmatpush1.xpose.msra.mxu0 0.0
        %1781 = vmatprep.subr.mxu0 0.0
        %1782 = vmatpush1.xpose.msra.mxu0 0.0
        %1783 = vmatprep.subr.mxu0 0.0
        %1784 = vmatpush1.xpose.msra.mxu0 0.0
        %1785 = vmatprep.subr.mxu0 0.0
        %1786 = vmatpush1.xpose.msra.mxu0 0.0
        %1787 = vmatprep.subr.mxu0 0.0
        %1788 = vmatpush1.xpose.msra.mxu0 0.0
        %1789 = vmatprep.subr.mxu0 0.0
        %1790 = vmatpush1.xpose.msra.mxu0 0.0
        %1791 = vmatprep.subr.mxu0 0.0
        %1792 = vmatpush1.xpose.msra.mxu0 0.0
        %1793 = vmatprep.subr.mxu0 0.0
        %1794 = vmatpush1.xpose.msra.mxu0 0.0
        %1795 = vmatprep.subr.mxu0 0.0
        %1796 = vmatpush1.xpose.msra.mxu0 0.0
        %1797 = vmatprep.subr.mxu0 0.0
        %1798 = vmatpush1.xpose.msra.mxu0 0.0
        %1799 = vmatprep.subr.mxu0 0.0
        %1800 = vmatpush1.xpose.msra.mxu0 0.0
        %1801 = vmatprep.subr.mxu0 0.0
        %1802 = vmatpush1.xpose.msra.mxu0 0.0
        %1803 = vmatprep.subr.mxu0 0.0
        %1804 = vmatpush1.xpose.msra.mxu0 0.0
        %1805 = vmatprep.subr.mxu0 0.0
        %1806 = vmatpush1.xpose.msra.mxu0 0.0
        %1807 = vmatprep.subr.mxu0 0.0
        %1808 = vmatpush1.xpose.msra.mxu0 0.0
        %1809 = vmatprep.subr.mxu0 0.0
        %1810 = vmatpush1.xpose.msra.mxu0 0.0
        %1811 = vmatprep.subr.mxu0 0.0
        %1812 = vmatpush1.xpose.msra.mxu0 0.0
        %1813 = vmatprep.subr.mxu0 0.0
        %1814 = vmatpush1.xpose.msra.mxu0 0.0
        %1815 = vmatprep.subr.mxu0 0.0
        %1816 = vmatpush1.xpose.msra.mxu0 0.0
        %1817 = vmatprep.subr.mxu0 0.0
        %1818 = vmatpush1.xpose.msra.mxu0 0.0
        %1819 = vmatprep.subr.mxu0 0.0
        %1820 = vmatpush1.xpose.msra.mxu0 0.0
        %1821 = vmatprep.subr.mxu0 0.0
        %1822 = vmatpush1.xpose.msra.mxu0 0.0
        %1823 = vmatprep.subr.mxu0 0.0
        %1824 = vmatpush1.xpose.msra.mxu0 0.0
        %1825 = vmatprep.subr.mxu0 0.0
        %1826 = vmatpush1.xpose.msra.mxu0 0.0
        %1827 = vmatprep.subr.mxu0 0.0
        %1828 = vmatpush1.xpose.msra.mxu0 0.0
        %1829 = vmatprep.subr.mxu0 0.0
        %1830 = vmatpush1.xpose.msra.mxu0 0.0
        %1831 = vmatprep.subr.mxu0 0.0
        %1832 = vmatpush1.xpose.msra.mxu0 0.0
        %1833 = vmatprep.mubr.f32.mxu0 0.0
        %1834 = vmatmul.mubr.f32.gmra.mrb[0].mxu0 %v1765
        %v1835 = vpop.f32.mrb[0].mxu0
        %v1836 = vadd.f32 0.0, %v1835
        %v1837 = vpop.f32.mrb[0].mxu0
        %1838 = vdwg.mxu0
        %1839 = vrot.lane.b32.xlu0 %v763, 104
        %v1840 = vpop.permute.xlu0 %1839
        %1841 = vrot.lane.b32.xlu0 %v763, 72
        %v1842 = vpop.permute.xlu0 %1841
        %v1843 = vsel %vm769, %v1840, 0
        %v1845 = vsel %vm769, %v1842, 0
        %1847 = vmatprep.subr.mxu0 0.0
        %1848 = vmatpush1.xpose.msra.mxu0 %v1845
        %1849 = vmatprep.subr.mxu0 0.0
        %1850 = vmatpush1.xpose.msra.mxu0 0.0
        %1851 = vmatprep.subr.mxu0 0.0
        %1852 = vmatpush1.xpose.msra.mxu0 0.0
        %1853 = vmatprep.subr.mxu0 0.0
        %1854 = vmatpush1.xpose.msra.mxu0 0.0
        %1855 = vmatprep.subr.mxu0 0.0
        %1856 = vmatpush1.xpose.msra.mxu0 0.0
        %1857 = vmatprep.subr.mxu0 0.0
        %1858 = vmatpush1.xpose.msra.mxu0 0.0
        %1859 = vmatprep.subr.mxu0 0.0
        %1860 = vmatpush1.xpose.msra.mxu0 0.0
        %1861 = vmatprep.subr.mxu0 0.0
        %1862 = vmatpush1.xpose.msra.mxu0 0.0
        %1863 = vmatprep.subr.mxu0 0.0
        %1864 = vmatpush1.xpose.msra.mxu0 0.0
        %1865 = vmatprep.subr.mxu0 0.0
        %1866 = vmatpush1.xpose.msra.mxu0 0.0
        %1867 = vmatprep.subr.mxu0 0.0
        %1868 = vmatpush1.xpose.msra.mxu0 0.0
        %1869 = vmatprep.subr.mxu0 0.0
        %1870 = vmatpush1.xpose.msra.mxu0 0.0
        %1871 = vmatprep.subr.mxu0 0.0
        %1872 = vmatpush1.xpose.msra.mxu0 0.0
        %1873 = vmatprep.subr.mxu0 0.0
        %1874 = vmatpush1.xpose.msra.mxu0 0.0
        %1875 = vmatprep.subr.mxu0 0.0
        %1876 = vmatpush1.xpose.msra.mxu0 0.0
        %1877 = vmatprep.subr.mxu0 0.0
        %1878 = vmatpush1.xpose.msra.mxu0 0.0
        %1879 = vmatprep.subr.mxu0 0.0
        %1880 = vmatpush1.xpose.msra.mxu0 0.0
        %1881 = vmatprep.subr.mxu0 0.0
        %1882 = vmatpush1.xpose.msra.mxu0 0.0
        %1883 = vmatprep.subr.mxu0 0.0
        %1884 = vmatpush1.xpose.msra.mxu0 0.0
        %1885 = vmatprep.subr.mxu0 0.0
        %1886 = vmatpush1.xpose.msra.mxu0 0.0
        %1887 = vmatprep.subr.mxu0 0.0
        %1888 = vmatpush1.xpose.msra.mxu0 0.0
        %1889 = vmatprep.subr.mxu0 0.0
        %1890 = vmatpush1.xpose.msra.mxu0 0.0
        %1891 = vmatprep.subr.mxu0 0.0
        %1892 = vmatpush1.xpose.msra.mxu0 0.0
        %1893 = vmatprep.subr.mxu0 0.0
        %1894 = vmatpush1.xpose.msra.mxu0 0.0
        %1895 = vmatprep.subr.mxu0 0.0
        %1896 = vmatpush1.xpose.msra.mxu0 0.0
        %1897 = vmatprep.subr.mxu0 0.0
        %1898 = vmatpush1.xpose.msra.mxu0 0.0
        %1899 = vmatprep.subr.mxu0 0.0
        %1900 = vmatpush1.xpose.msra.mxu0 0.0
        %1901 = vmatprep.subr.mxu0 0.0
        %1902 = vmatpush1.xpose.msra.mxu0 0.0
        %1903 = vmatprep.subr.mxu0 0.0
        %1904 = vmatpush1.xpose.msra.mxu0 0.0
        %1905 = vmatprep.subr.mxu0 0.0
        %1906 = vmatpush1.xpose.msra.mxu0 0.0
        %1907 = vmatprep.subr.mxu0 0.0
        %1908 = vmatpush1.xpose.msra.mxu0 0.0
        %1909 = vmatprep.subr.mxu0 0.0
        %1910 = vmatpush1.xpose.msra.mxu0 0.0
        %1911 = vmatprep.mubr.f32.mxu0 0.0
        %1912 = vmatmul.mubr.f32.gmra.mrb[0].mxu0 %v1843
        %v1913 = vpop.f32.mrb[0].mxu0
        %v1914 = vadd.f32 0.0, %v1913
        %v1915 = vpop.f32.mrb[0].mxu0
        %1916 = vdwg.mxu0
        %v1917 = vmul.f32 %v1836, 0.35355338
        %v1918 = vmul.f32 %v1914, 0.35355338
        %v1919 = vsel %vm769, %v1917, -inf
        %1920 = vmax.xlane.f32.xlu0 %v1919
        %v1921 = vpop.xlane.xlu0 %1920
        %v1922 = vsel %vm769, %v1918, -inf
        %1923 = vmax.xlane.f32.xlu0 %v1922
        %v1924 = vpop.xlane.xlu0 %1923
        %v1925 = vsub.f32 %v1917, %v1921
        %v1926 = vsub.f32 %v1918, %v1924
        %v1927 = vmul.f32 %v1925, 1.442695
        %v1928 = vpow.pop %v1927
        %v1929 = vmul.f32 %v1926, 1.442695
        %v1930 = vpow.pop %v1929
        %v1931 = vsel %vm769, %v1928, 0.0
        %1932 = vadd.xlane.f32.xlu0 %v1931
        %v1933 = vpop.xlane.xlu0 %1932
        %v1934 = vsel %vm769, %v1930, 0.0
        %1935 = vadd.xlane.f32.xlu0 %v1934
        %v1936 = vpop.xlane.xlu0 %1935
        %v1937 = vrcp.pop %v1933
        %v1938 = vrcp.pop %v1936
        %v1939 = vmul.f32 %v1928, %v1937
        %v1940 = vmul.f32 %v1930, %v1938
        %1941 = vrot.lane.b32.xlu0 %v758, 40
        %v1942 = vpop.permute.xlu0 %1941
        %v1945 = vsel %vm769, %v1939, 0
        %1947 = vmatprep.subr.mxu0 0.0
        %1948 = vmatpush1.msra.mxu0 %v1942
        %1949 = vmatprep.subr.mxu0 0.0
        %1950 = vmatpush1.msra.mxu0 0.0
        %1951 = vmatprep.subr.mxu0 0.0
        %1952 = vmatpush1.msra.mxu0 0.0
        %1953 = vmatprep.subr.mxu0 0.0
        %1954 = vmatpush1.msra.mxu0 0.0
        %1955 = vmatprep.subr.mxu0 0.0
        %1956 = vmatpush1.msra.mxu0 0.0
        %1957 = vmatprep.subr.mxu0 0.0
        %1958 = vmatpush1.msra.mxu0 0.0
        %1959 = vmatprep.subr.mxu0 0.0
        %1960 = vmatpush1.msra.mxu0 0.0
        %1961 = vmatprep.subr.mxu0 0.0
        %1962 = vmatpush1.msra.mxu0 0.0
        %1963 = vmatprep.subr.mxu0 0.0
        %1964 = vmatpush1.msra.mxu0 0.0
        %1965 = vmatprep.subr.mxu0 0.0
        %1966 = vmatpush1.msra.mxu0 0.0
        %1967 = vmatprep.subr.mxu0 0.0
        %1968 = vmatpush1.msra.mxu0 0.0
        %1969 = vmatprep.subr.mxu0 0.0
        %1970 = vmatpush1.msra.mxu0 0.0
        %1971 = vmatprep.subr.mxu0 0.0
        %1972 = vmatpush1.msra.mxu0 0.0
        %1973 = vmatprep.subr.mxu0 0.0
        %1974 = vmatpush1.msra.mxu0 0.0
        %1975 = vmatprep.subr.mxu0 0.0
        %1976 = vmatpush1.msra.mxu0 0.0
        %1977 = vmatprep.subr.mxu0 0.0
        %1978 = vmatpush1.msra.mxu0 0.0
        %1979 = vmatprep.subr.mxu0 0.0
        %1980 = vmatpush1.msra.mxu0 0.0
        %1981 = vmatprep.subr.mxu0 0.0
        %1982 = vmatpush1.msra.mxu0 0.0
        %1983 = vmatprep.subr.mxu0 0.0
        %1984 = vmatpush1.msra.mxu0 0.0
        %1985 = vmatprep.subr.mxu0 0.0
        %1986 = vmatpush1.msra.mxu0 0.0
        %1987 = vmatprep.subr.mxu0 0.0
        %1988 = vmatpush1.msra.mxu0 0.0
        %1989 = vmatprep.subr.mxu0 0.0
        %1990 = vmatpush1.msra.mxu0 0.0
        %1991 = vmatprep.subr.mxu0 0.0
        %1992 = vmatpush1.msra.mxu0 0.0
        %1993 = vmatprep.subr.mxu0 0.0
        %1994 = vmatpush1.msra.mxu0 0.0
        %1995 = vmatprep.subr.mxu0 0.0
        %1996 = vmatpush1.msra.mxu0 0.0
        %1997 = vmatprep.subr.mxu0 0.0
        %1998 = vmatpush1.msra.mxu0 0.0
        %1999 = vmatprep.subr.mxu0 0.0
        %2000 = vmatpush1.msra.mxu0 0.0
        %2001 = vmatprep.subr.mxu0 0.0
        %2002 = vmatpush1.msra.mxu0 0.0
        %2003 = vmatprep.subr.mxu0 0.0
        %2004 = vmatpush1.msra.mxu0 0.0
        %2005 = vmatprep.subr.mxu0 0.0
        %2006 = vmatpush1.msra.mxu0 0.0
        %2007 = vmatprep.subr.mxu0 0.0
        %2008 = vmatpush1.msra.mxu0 0.0
        %2009 = vmatprep.subr.mxu0 0.0
        %2010 = vmatpush1.msra.mxu0 0.0
        %2011 = vmatprep.mubr.f32.mxu0 0.0
        %2012 = vmatmul.mubr.f32.gmra.mrb[0].mxu0 %v1945
        %v2013 = vpop.f32.mrb[0].mxu0
        %v2014 = vadd.f32 0.0, %v2013
        %v2015 = vpop.f32.mrb[0].mxu0
        %2016 = vdwg.mxu0
        %2017 = vrot.lane.b32.xlu0 %v763, 40
        %v2018 = vpop.permute.xlu0 %2017
        %v2021 = vsel %vm769, %v1940, 0
        %2023 = vmatprep.subr.mxu0 0.0
        %2024 = vmatpush1.msra.mxu0 %v2018
        %2025 = vmatprep.subr.mxu0 0.0
        %2026 = vmatpush1.msra.mxu0 0.0
        %2027 = vmatprep.subr.mxu0 0.0
        %2028 = vmatpush1.msra.mxu0 0.0
        %2029 = vmatprep.subr.mxu0 0.0
        %2030 = vmatpush1.msra.mxu0 0.0
        %2031 = vmatprep.subr.mxu0 0.0
        %2032 = vmatpush1.msra.mxu0 0.0
        %2033 = vmatprep.subr.mxu0 0.0
        %2034 = vmatpush1.msra.mxu0 0.0
        %2035 = vmatprep.subr.mxu0 0.0
        %2036 = vmatpush1.msra.mxu0 0.0
        %2037 = vmatprep.subr.mxu0 0.0
        %2038 = vmatpush1.msra.mxu0 0.0
        %2039 = vmatprep.subr.mxu0 0.0
        %2040 = vmatpush1.msra.mxu0 0.0
        %2041 = vmatprep.subr.mxu0 0.0
        %2042 = vmatpush1.msra.mxu0 0.0
        %2043 = vmatprep.subr.mxu0 0.0
        %2044 = vmatpush1.msra.mxu0 0.0
        %2045 = vmatprep.subr.mxu0 0.0
        %2046 = vmatpush1.msra.mxu0 0.0
        %2047 = vmatprep.subr.mxu0 0.0
        %2048 = vmatpush1.msra.mxu0 0.0
        %2049 = vmatprep.subr.mxu0 0.0
        %2050 = vmatpush1.msra.mxu0 0.0
        %2051 = vmatprep.subr.mxu0 0.0
        %2052 = vmatpush1.msra.mxu0 0.0
        %2053 = vmatprep.subr.mxu0 0.0
        %2054 = vmatpush1.msra.mxu0 0.0
        %2055 = vmatprep.subr.mxu0 0.0
        %2056 = vmatpush1.msra.mxu0 0.0
        %2057 = vmatprep.subr.mxu0 0.0
        %2058 = vmatpush1.msra.mxu0 0.0
        %2059 = vmatprep.subr.mxu0 0.0
        %2060 = vmatpush1.msra.mxu0 0.0
        %2061 = vmatprep.subr.mxu0 0.0
        %2062 = vmatpush1.msra.mxu0 0.0
        %2063 = vmatprep.subr.mxu0 0.0
        %2064 = vmatpush1.msra.mxu0 0.0
        %2065 = vmatprep.subr.mxu0 0.0
        %2066 = vmatpush1.msra.mxu0 0.0
        %2067 = vmatprep.subr.mxu0 0.0
        %2068 = vmatpush1.msra.mxu0 0.0
        %2069 = vmatprep.subr.mxu0 0.0
        %2070 = vmatpush1.msra.mxu0 0.0
        %2071 = vmatprep.subr.mxu0 0.0
        %2072 = vmatpush1.msra.mxu0 0.0
        %2073 = vmatprep.subr.mxu0 0.0
        %2074 = vmatpush1.msra.mxu0 0.0
        %2075 = vmatprep.subr.mxu0 0.0
        %2076 = vmatpush1.msra.mxu0 0.0
        %2077 = vmatprep.subr.mxu0 0.0
        %2078 = vmatpush1.msra.mxu0 0.0
        %2079 = vmatprep.subr.mxu0 0.0
        %2080 = vmatpush1.msra.mxu0 0.0
        %2081 = vmatprep.subr.mxu0 0.0
        %2082 = vmatpush1.msra.mxu0 0.0
        %2083 = vmatprep.subr.mxu0 0.0
        %2084 = vmatpush1.msra.mxu0 0.0
        %2085 = vmatprep.subr.mxu0 0.0
        %2086 = vmatpush1.msra.mxu0 0.0
        %2087 = vmatprep.mubr.f32.mxu0 0.0
        %2088 = vmatmul.mubr.f32.gmra.mrb[0].mxu0 %v2021
        %v2089 = vpop.f32.mrb[0].mxu0
        %v2090 = vadd.f32 0.0, %v2089
        %v2091 = vpop.f32.mrb[0].mxu0
        %2092 = vdwg.mxu0
        %2095 = vrot.lane.b32.xlu0 %v1350, 8
        %v2096 = vpop.permute.xlu0 %2095
        %2097 = vrot.lane.b32.xlu0 %v1426, 8
        %v2098 = vpop.permute.xlu0 %2097
        %2103 = vrot.lane.b32.xlu0 %v1682, 16
        %v2104 = vpop.permute.xlu0 %2103
        %2105 = vrot.lane.b32.xlu0 %v1758, 16
        %v2106 = vpop.permute.xlu0 %2105
        %2111 = vrot.lane.b32.xlu0 %v2014, 24
        %v2112 = vpop.permute.xlu0 %2111
        %2113 = vrot.lane.b32.xlu0 %v2090, 24
        %v2114 = vpop.permute.xlu0 %2113
        %v2117 = vsel %vm769, %v1018, %v2096
        %v2118 = vsel %vm769, %v1094, %v2098
        %vm2119 = vcmask 130048
        %v2120 = vsel %vm2119, %v2117, %v2104
        %v2121 = vsel %vm2119, %v2118, %v2106
        %vm2122 = vcmask 195584
        %v2123 = vsel %vm2122, %v2120, %v2112
        %v2124 = vsel %vm2122, %v2121, %v2114
        %v2125 = vld [vmem:[%s597] sm:$0xff]
        %v2126 = vld [vmem:[%s597 + $0x8] sm:$0xff]
        %v2127 = vld [vmem:[%s597 + $0x10] sm:$0xff]
        %v2128 = vld [vmem:[%s597 + $0x18] sm:$0xff]
        %v2130 = vsel %vm637, %v2123, 0
        %v2133 = vsel %vm637, %v2124, 0
        %2135 = vmatprep.subr.mxu0 0.0
        %2136 = vmatpush1.msra.mxu0 %v2125
        %2137 = vmatprep.subr.mxu0 0.0
        %2138 = vmatpush1.msra.mxu0 %v2126
        %2139 = vmatprep.subr.mxu0 0.0
        %2140 = vmatpush1.msra.mxu0 %v2127
        %2141 = vmatprep.subr.mxu0 0.0
        %2142 = vmatpush1.msra.mxu0 %v2128
        %2143 = vmatprep.subr.mxu0 0.0
        %2144 = vmatpush1.msra.mxu0 0.0
        %2145 = vmatprep.subr.mxu0 0.0
        %2146 = vmatpush1.msra.mxu0 0.0
        %2147 = vmatprep.subr.mxu0 0.0
        %2148 = vmatpush1.msra.mxu0 0.0
        %2149 = vmatprep.subr.mxu0 0.0
        %2150 = vmatpush1.msra.mxu0 0.0
        %2151 = vmatprep.subr.mxu0 0.0
        %2152 = vmatpush1.msra.mxu0 0.0
        %2153 = vmatprep.subr.mxu0 0.0
        %2154 = vmatpush1.msra.mxu0 0.0
        %2155 = vmatprep.subr.mxu0 0.0
        %2156 = vmatpush1.msra.mxu0 0.0
        %2157 = vmatprep.subr.mxu0 0.0
        %2158 = vmatpush1.msra.mxu0 0.0
        %2159 = vmatprep.subr.mxu0 0.0
        %2160 = vmatpush1.msra.mxu0 0.0
        %2161 = vmatprep.subr.mxu0 0.0
        %2162 = vmatpush1.msra.mxu0 0.0
        %2163 = vmatprep.subr.mxu0 0.0
        %2164 = vmatpush1.msra.mxu0 0.0
        %2165 = vmatprep.subr.mxu0 0.0
        %2166 = vmatpush1.msra.mxu0 0.0
        %2167 = vmatprep.subr.mxu0 0.0
        %2168 = vmatpush1.msra.mxu0 0.0
        %2169 = vmatprep.subr.mxu0 0.0
        %2170 = vmatpush1.msra.mxu0 0.0
        %2171 = vmatprep.subr.mxu0 0.0
        %2172 = vmatpush1.msra.mxu0 0.0
        %2173 = vmatprep.subr.mxu0 0.0
        %2174 = vmatpush1.msra.mxu0 0.0
        %2175 = vmatprep.subr.mxu0 0.0
        %2176 = vmatpush1.msra.mxu0 0.0
        %2177 = vmatprep.subr.mxu0 0.0
        %2178 = vmatpush1.msra.mxu0 0.0
        %2179 = vmatprep.subr.mxu0 0.0
        %2180 = vmatpush1.msra.mxu0 0.0
        %2181 = vmatprep.subr.mxu0 0.0
        %2182 = vmatpush1.msra.mxu0 0.0
        %2183 = vmatprep.subr.mxu0 0.0
        %2184 = vmatpush1.msra.mxu0 0.0
        %2185 = vmatprep.subr.mxu0 0.0
        %2186 = vmatpush1.msra.mxu0 0.0
        %2187 = vmatprep.subr.mxu0 0.0
        %2188 = vmatpush1.msra.mxu0 0.0
        %2189 = vmatprep.subr.mxu0 0.0
        %2190 = vmatpush1.msra.mxu0 0.0
        %2191 = vmatprep.subr.mxu0 0.0
        %2192 = vmatpush1.msra.mxu0 0.0
        %2193 = vmatprep.subr.mxu0 0.0
        %2194 = vmatpush1.msra.mxu0 0.0
        %2195 = vmatprep.subr.mxu0 0.0
        %2196 = vmatpush1.msra.mxu0 0.0
        %2197 = vmatprep.subr.mxu0 0.0
        %2198 = vmatpush1.msra.mxu0 0.0
        %2199 = vmatprep.mubr.f32.mxu0 0.0
        %2200 = vmatmul.mubr.f32.gmra.mrb[0].mxu0 %v2130
        %v2201 = vpop.f32.mrb[0].mxu0
        %v2202 = vadd.f32 0.0, %v2201
        %v2203 = vpop.f32.mrb[0].mxu0
        %2204 = vmatprep.mubr.f32.mxu0 0.0
        %2205 = vmatmul.mubr.f32.gmra.mrb[0].mxu0 %v2133
        %v2206 = vpop.f32.mrb[0].mxu0
        %v2207 = vadd.f32 0.0, %v2206
        %v2208 = vpop.f32.mrb[0].mxu0
        %2209 = vdwg.mxu0
        %v2210 = vadd.f32 %v633, %v2202
        %v2211 = vadd.f32 %v634, %v2207
        %v2212 = vld [vmem:[%s600] sm:$0x1]
        %v2214 = vlaneseq
        %v2215 = vshrl.u32 %v2214, 7
        %v2216 = vsub.s32 0, %v2215
        %v2217 = vrot.slane %v2212, %v2216
        %v2219 = vadd.f32 %v2210, %v2217
        %v2220 = vadd.f32 %v2211, %v2217
        %v2221 = vld [vmem:[%s603] sm:$0x1]
        %v2222 = vld [vmem:[%s606] sm:$0x1]
        %v2223 = vsel %vm637, %v2219, 0.0
        %2224 = vadd.xlane.f32.xlu0 %v2223
        %v2225 = vpop.xlane.xlu0 %2224
        %v2226 = vsel %vm637, %v2220, 0.0
        %2227 = vadd.xlane.f32.xlu0 %v2226
        %v2228 = vpop.xlane.xlu0 %2227
        %v2229 = vmul.f32 %v2225, %v644
        %v2230 = vmul.f32 %v2228, %v644
        %v2231 = vsub.f32 %v2219, %v2229
        %v2232 = vsub.f32 %v2220, %v2230
        %v2233 = vmul.f32 %v2231, %v2231
        %v2234 = vmul.f32 %v2232, %v2232
        %v2235 = vsel %vm637, %v2233, 0.0
        %2236 = vadd.xlane.f32.xlu0 %v2235
        %v2237 = vpop.xlane.xlu0 %2236
        %v2238 = vsel %vm637, %v2234, 0.0
        %2239 = vadd.xlane.f32.xlu0 %v2238
        %v2240 = vpop.xlane.xlu0 %2239
        %v2241 = vmul.f32 %v2237, %v644
        %v2242 = vmul.f32 %v2240, %v644
        %v2243 = vadd.f32 %v2241, 1e-05
        %v2244 = vadd.f32 %v2242, 1e-05
        %v2245 = vrsqrt.pop %v2243
        %v2246 = vrsqrt.pop %v2244
        %v2247 = vmul.f32 %v2231, %v2245
        %v2248 = vmul.f32 %v2232, %v2246
        %v2250 = vlaneseq
        %v2251 = vshrl.u32 %v2250, 7
        %v2252 = vsub.s32 0, %v2251
        %v2253 = vrot.slane %v2221, %v2252
        %v2255 = vmul.f32 %v2247, %v2253
        %v2256 = vmul.f32 %v2248, %v2253
        %v2258 = vlaneseq
        %v2259 = vshrl.u32 %v2258, 7
        %v2260 = vsub.s32 0, %v2259
        %v2261 = vrot.slane %v2222, %v2260
        %v2263 = vadd.f32 %v2255, %v2261
        %v2264 = vadd.f32 %v2256, %v2261
        %v2265 = vld [vmem:[%s611] sm:$0xff]
        %v2266 = vld [vmem:[%s611 + $0x8] sm:$0xff]
        %v2267 = vld [vmem:[%s611 + $0x10] sm:$0xff]
        %v2268 = vld [vmem:[%s611 + $0x18] sm:$0xff]
        %v2269 = vld [vmem:[%s614] sm:$0x1]
        %v2271 = vlaneseq
        %v2272 = vshrl.u32 %v2271, 7
        %v2273 = vsub.s32 0, %v2272
        %v2274 = vrot.slane %v2269, %v2273
        %v2277 = vsel %vm637, %v2263, 0
        %v2280 = vsel %vm637, %v2264, 0
        %2282 = vmatprep.subr.mxu0 0.0
        %2283 = vmatpush1.msra.mxu0 %v2265
        %2284 = vmatprep.subr.mxu0 0.0
        %2285 = vmatpush1.msra.mxu0 %v2266
        %2286 = vmatprep.subr.mxu0 0.0
        %2287 = vmatpush1.msra.mxu0 %v2267
        %2288 = vmatprep.subr.mxu0 0.0
        %2289 = vmatpush1.msra.mxu0 %v2268
        %2290 = vmatprep.subr.mxu0 0.0
        %2291 = vmatpush1.msra.mxu0 0.0
        %2292 = vmatprep.subr.mxu0 0.0
        %2293 = vmatpush1.msra.mxu0 0.0
        %2294 = vmatprep.subr.mxu0 0.0
        %2295 = vmatpush1.msra.mxu0 0.0
        %2296 = vmatprep.subr.mxu0 0.0
        %2297 = vmatpush1.msra.mxu0 0.0
        %2298 = vmatprep.subr.mxu0 0.0
        %2299 = vmatpush1.msra.mxu0 0.0
        %2300 = vmatprep.subr.mxu0 0.0
        %2301 = vmatpush1.msra.mxu0 0.0
        %2302 = vmatprep.subr.mxu0 0.0
        %2303 = vmatpush1.msra.mxu0 0.0
        %2304 = vmatprep.subr.mxu0 0.0
        %2305 = vmatpush1.msra.mxu0 0.0
        %2306 = vmatprep.subr.mxu0 0.0
        %2307 = vmatpush1.msra.mxu0 0.0
        %2308 = vmatprep.subr.mxu0 0.0
        %2309 = vmatpush1.msra.mxu0 0.0
        %2310 = vmatprep.subr.mxu0 0.0
        %2311 = vmatpush1.msra.mxu0 0.0
        %2312 = vmatprep.subr.mxu0 0.0
        %2313 = vmatpush1.msra.mxu0 0.0
        %2314 = vmatprep.subr.mxu0 0.0
        %2315 = vmatpush1.msra.mxu0 0.0
        %2316 = vmatprep.subr.mxu0 0.0
        %2317 = vmatpush1.msra.mxu0 0.0
        %2318 = vmatprep.subr.mxu0 0.0
        %2319 = vmatpush1.msra.mxu0 0.0
        %2320 = vmatprep.subr.mxu0 0.0
        %2321 = vmatpush1.msra.mxu0 0.0
        %2322 = vmatprep.subr.mxu0 0.0
        %2323 = vmatpush1.msra.mxu0 0.0
        %2324 = vmatprep.subr.mxu0 0.0
        %2325 = vmatpush1.msra.mxu0 0.0
        %2326 = vmatprep.subr.mxu0 0.0
        %2327 = vmatpush1.msra.mxu0 0.0
        %2328 = vmatprep.subr.mxu0 0.0
        %2329 = vmatpush1.msra.mxu0 0.0
        %2330 = vmatprep.subr.mxu0 0.0
        %2331 = vmatpush1.msra.mxu0 0.0
        %2332 = vmatprep.subr.mxu0 0.0
        %2333 = vmatpush1.msra.mxu0 0.0
        %2334 = vmatprep.subr.mxu0 0.0
        %2335 = vmatpush1.msra.mxu0 0.0
        %2336 = vmatprep.subr.mxu0 0.0
        %2337 = vmatpush1.msra.mxu0 0.0
        %2338 = vmatprep.subr.mxu0 0.0
        %2339 = vmatpush1.msra.mxu0 0.0
        %2340 = vmatprep.subr.mxu0 0.0
        %2341 = vmatpush1.msra.mxu0 0.0
        %2342 = vmatprep.subr.mxu0 0.0
        %2343 = vmatpush1.msra.mxu0 0.0
        %2344 = vmatprep.subr.mxu0 0.0
        %2345 = vmatpush1.msra.mxu0 0.0
        %2346 = vmatprep.mubr.f32.mxu0 0.0
        %2347 = vmatmul.mubr.f32.gmra.mrb[0].mxu0 %v2277
        %v2348 = vpop.f32.mrb[0].mxu0
        %v2349 = vadd.f32 %v2274, %v2348
        %v2350 = vpop.f32.mrb[0].mxu0
        %2351 = vmatprep.mubr.f32.mxu0 0.0
        %2352 = vmatmul.mubr.f32.gmra.mrb[0].mxu0 %v2280
        %v2353 = vpop.f32.mrb[0].mxu0
        %v2354 = vadd.f32 %v2274, %v2353
        %v2355 = vpop.f32.mrb[0].mxu0
        %2356 = vdwg.mxu0
        %v2357 = vmul.f32 %v2349, 0.5
        %v2358 = vmul.f32 %v2354, 0.5
        %v2359 = vmul.f32 %v2349, 0.70710677
        %v2360 = vmul.f32 %v2354, 0.70710677
        %v2361 = verf.f32.pop %v2359
        %v2362 = verf.f32.pop %v2360
        %v2363 = vadd.f32 %v2361, 1.0
        %v2364 = vadd.f32 %v2362, 1.0
        %v2365 = vmul.f32 %v2357, %v2363
        %v2366 = vmul.f32 %v2358, %v2364
        %v2367 = vld [vmem:[%s619] sm:$0xff]
        %v2368 = vld [vmem:[%s619 + $0x8] sm:$0xff]
        %v2369 = vld [vmem:[%s619 + $0x10] sm:$0xff]
        %v2370 = vld [vmem:[%s619 + $0x18] sm:$0xff]
        %v2371 = vld [vmem:[%s619 + $0x20] sm:$0xff]
        %v2372 = vld [vmem:[%s619 + $0x28] sm:$0xff]
        %v2373 = vld [vmem:[%s619 + $0x30] sm:$0xff]
        %v2374 = vld [vmem:[%s619 + $0x38] sm:$0xff]
        %vm2375 = vcmask 523264
        %v2377 = vsel %vm2375, %v2365, 0
        %v2380 = vsel %vm2375, %v2366, 0
        %2382 = vmatprep.subr.mxu0 0.0
        %2383 = vmatpush1.msra.mxu0 %v2367
        %2384 = vmatprep.subr.mxu0 0.0
        %2385 = vmatpush1.msra.mxu0 %v2368
        %2386 = vmatprep.subr.mxu0 0.0
        %2387 = vmatpush1.msra.mxu0 %v2369
        %2388 = vmatprep.subr.mxu0 0.0
        %2389 = vmatpush1.msra.mxu0 %v2370
        %2390 = vmatprep.subr.mxu0 0.0
        %2391 = vmatpush1.msra.mxu0 %v2371
        %2392 = vmatprep.subr.mxu0 0.0
        %2393 = vmatpush1.msra.mxu0 %v2372
        %2394 = vmatprep.subr.mxu0 0.0
        %2395 = vmatpush1.msra.mxu0 %v2373
        %2396 = vmatprep.subr.mxu0 0.0
        %2397 = vmatpush1.msra.mxu0 %v2374
        %2398 = vmatprep.subr.mxu0 0.0
        %2399 = vmatpush1.msra.mxu0 0.0
        %2400 = vmatprep.subr.mxu0 0.0
        %2401 = vmatpush1.msra.mxu0 0.0
        %2402 = vmatprep.subr.mxu0 0.0
        %2403 = vmatpush1.msra.mxu0 0.0
        %2404 = vmatprep.subr.mxu0 0.0
        %2405 = vmatpush1.msra.mxu0 0.0
        %2406 = vmatprep.subr.mxu0 0.0
        %2407 = vmatpush1.msra.mxu0 0.0
        %2408 = vmatprep.subr.mxu0 0.0
        %2409 = vmatpush1.msra.mxu0 0.0
        %2410 = vmatprep.subr.mxu0 0.0
        %2411 = vmatpush1.msra.mxu0 0.0
        %2412 = vmatprep.subr.mxu0 0.0
        %2413 = vmatpush1.msra.mxu0 0.0
        %2414 = vmatprep.subr.mxu0 0.0
        %2415 = vmatpush1.msra.mxu0 0.0
        %2416 = vmatprep.subr.mxu0 0.0
        %2417 = vmatpush1.msra.mxu0 0.0
        %2418 = vmatprep.subr.mxu0 0.0
        %2419 = vmatpush1.msra.mxu0 0.0
        %2420 = vmatprep.subr.mxu0 0.0
        %2421 = vmatpush1.msra.mxu0 0.0
        %2422 = vmatprep.subr.mxu0 0.0
        %2423 = vmatpush1.msra.mxu0 0.0
        %2424 = vmatprep.subr.mxu0 0.0
        %2425 = vmatpush1.msra.mxu0 0.0
        %2426 = vmatprep.subr.mxu0 0.0
        %2427 = vmatpush1.msra.mxu0 0.0
        %2428 = vmatprep.subr.mxu0 0.0
        %2429 = vmatpush1.msra.mxu0 0.0
        %2430 = vmatprep.subr.mxu0 0.0
        %2431 = vmatpush1.msra.mxu0 0.0
        %2432 = vmatprep.subr.mxu0 0.0
        %2433 = vmatpush1.msra.mxu0 0.0
        %2434 = vmatprep.subr.mxu0 0.0
        %2435 = vmatpush1.msra.mxu0 0.0
        %2436 = vmatprep.subr.mxu0 0.0
        %2437 = vmatpush1.msra.mxu0 0.0
        %2438 = vmatprep.subr.mxu0 0.0
        %2439 = vmatpush1.msra.mxu0 0.0
        %2440 = vmatprep.subr.mxu0 0.0
        %2441 = vmatpush1.msra.mxu0 0.0
        %2442 = vmatprep.subr.mxu0 0.0
        %2443 = vmatpush1.msra.mxu0 0.0
        %2444 = vmatprep.subr.mxu0 0.0
        %2445 = vmatpush1.msra.mxu0 0.0
        %2446 = vmatprep.mubr.f32.mxu0 0.0
        %2447 = vmatmul.mubr.f32.gmra.mrb[0].mxu0 %v2377
        %v2448 = vpop.f32.mrb[0].mxu0
        %v2449 = vadd.f32 0.0, %v2448
        %v2450 = vpop.f32.mrb[0].mxu0
        %2451 = vmatprep.mubr.f32.mxu0 0.0
        %2452 = vmatmul.mubr.f32.gmra.mrb[0].mxu0 %v2380
        %v2453 = vpop.f32.mrb[0].mxu0
        %v2454 = vadd.f32 0.0, %v2453
        %v2455 = vpop.f32.mrb[0].mxu0
        %2456 = vdwg.mxu0
        %v2457 = vadd.f32 %v2219, %v2449
        %v2458 = vadd.f32 %v2220, %v2454
        %v2459 = vld [vmem:[%s622] sm:$0x1]
        %v2461 = vlaneseq
        %v2462 = vshrl.u32 %v2461, 7
        %v2463 = vsub.s32 0, %v2462
        %v2464 = vrot.slane %v2459, %v2463
        %v2466 = vadd.f32 %v2457, %v2464
        %v2467 = vadd.f32 %v2458, %v2464
        %2468 = vst.msk [vmem:[%s580] sm:$0xff] %vm637, %v2466
        %2469 = vst.msk [vmem:[%s580 + $0x8] sm:$0xff] %vm637, %v2467
        %s2470 = sand.u32 %s361, 1
        %s2471 = scalar_lea.sflag [#allocation4], %s2470
        %s2472 = sand.u32 %s361, 1
        %s2473 = smul.addr %s2472, 16
        %s2474 = scalar_lea.vmem [#allocation5], %s2473
        // Predicated region
        $region77: #{tpu_custom_call.1} parent=67 // pred_check
          %p2475 = pneg %p371
        $region78: #{tpu_custom_call.1} parent=67 // pred_check_branch
          %2477 = sbr.rel (%p2475) target = $region80
        $region79: #{tpu_custom_call.1} parent=67 // pred_region
          %s2478 = smul.u32 2, %s33
          %s2480 = ssub.s32 256, 256
          %2481 = vsyncadd %s2471, %s2480
          %s2482 = smul.addr %s2478, 128
          %s2483 = scalar_lea.hbm %s12, %s2482
          %s2484 = sshll.u32 %s2474, 4
          %s2485 = int_to_ptr.vmem [resolvable:$true] %s2484
          %2490 = dma.vmem_to_hbm [thread:$0]  %s2485, 256, %s2483, %s2471, 128, 128, 8
        $region80: #{tpu_custom_call.1} parent=67 // pred_fallthru
          _
      $region68: #{tpu_custom_call.1} parent=5 // pred_fallthru
        _
      %p2491 = scmp.le.s32.totalorder 2, %s24
      // Predicated region
      $region81: #{tpu_custom_call.1} parent=5 // pred_check
        %p2492 = pneg %p2491
      $region82: #{tpu_custom_call.1} parent=5 // pred_check_branch
        %2494 = sbr.rel (%p2492) target = $region84
      $region83: #{tpu_custom_call.1} parent=5 // pred_region
        %s2495 = ssub.s32 %s24, 2
        // Predicated region
        $region85: #{tpu_custom_call.1} parent=83 // pred_check
          %p2496 = pneg %p377
        $region86: #{tpu_custom_call.1} parent=83 // pred_check_branch
          %2498 = sbr.rel (%p2496) target = $region88
        $region87: #{tpu_custom_call.1} parent=83 // pred_region
          %s2499 = sand.u32 %s362, 1
          %s2500 = scalar_lea.sflag [#allocation4], %s2499
          %s2501 = sand.u32 %s362, 1
          %s2502 = smul.addr %s2501, 16
          %s2503 = scalar_lea.vmem [#allocation5], %s2502
          %2504 = dma.done %s2500, 256
        $region88: #{tpu_custom_call.1} parent=83 // pred_fallthru
          _
      $region84: #{tpu_custom_call.1} parent=5 // pred_fallthru
        _
    $region6: #{tpu_custom_call.1} parent=1 // loop_footer
      %s28 = sadd.s32 1, %s24
    $region7: #{tpu_custom_call.1} parent=1 // loop_footer_branch
      %23 = sbr.rel target = $region3
    $region8: #{tpu_custom_call.1} parent=1 // loop_exit
      _
    %2505 = vsyncpa [#allocation3], 1
    %s2506 = scalar_lea.sflag [#allocation3], 1
    %2507 = vsyncpa %s2506, 1
    %2508 = vsyncpa [#allocation4], 1
    %s2509 = scalar_lea.sflag [#allocation4], 1
    %2510 = vsyncpa %s2509, 1

</llo_original>
